<compile_context>
chip_gen: v7x
topology: tpu7x:2x2x1
jax: 0.10.0
libtpu: 0.0.40
codegen_flags: <defaults>
</compile_context>

<pallas_src>
import functools

import jax
import jax.numpy as jnp
from jax.experimental import pallas as pl
from jax.experimental.pallas import tpu as pltpu


def _round_up(v, m):
    return (v + m - 1) // m * m


# ---------------------------------------------------------------------------
# Tiled matmul kernel with optional fused LayerNorm prologue, quick_gelu and
# residual-add epilogue.  bf16 MXU operands, f32 accumulation.
# ---------------------------------------------------------------------------

def _matmul_kernel(*refs, fuse_ln, has_res, activation, eps):
    x_ref, w_ref, b_ref = refs[0], refs[1], refs[2]
    idx = 3
    if fuse_ln:
        g_ref, beta_ref = refs[idx], refs[idx + 1]
        idx += 2
    if has_res:
        r_ref = refs[idx]
        idx += 1
    o_ref = refs[idx]
    acc_ref = refs[idx + 1]

    @pl.when(pl.program_id(2) == 0)
    def _():
        acc_ref[...] = jnp.zeros_like(acc_ref)

    x = x_ref[...]
    if fuse_ln:
        # LayerNorm prologue in f32 (rides VPU/XLU slack under the MXU-bound dot).
        xf = x.astype(jnp.float32)
        mean = jnp.mean(xf, axis=-1, keepdims=True)
        var = jnp.mean(jnp.square(xf - mean), axis=-1, keepdims=True)
        xf = (xf - mean) * jax.lax.rsqrt(var + eps)
        x = xf * g_ref[...] + beta_ref[...]
    x = x.astype(jnp.bfloat16)

    acc_ref[...] += jnp.dot(x, w_ref[...].astype(jnp.bfloat16),
                            preferred_element_type=jnp.float32)

    @pl.when(pl.program_id(2) == pl.num_programs(2) - 1)
    def _():
        out = acc_ref[...] + b_ref[...]
        if activation == "quick_gelu":
            out = out * jax.nn.sigmoid(1.702 * out)     # HF CLIP quick_gelu
        if has_res:
            out = out + r_ref[...]
        o_ref[...] = out.astype(o_ref.dtype)


def matmul_bias(x, w, b, *, ln=None, residual=None, activation=None, eps=1e-5):
    """y = [LN(x)] @ w + b [quick_gelu] [+ residual].

    x: (rows, K) f32, w: (K, M) bf16/f32, b: (M,) f32.  Returns (rows, M) f32.
    When `ln` is given, K is kept as a single full block (LN needs the whole row);
    otherwise K is zero-padded to a multiple of 128 and tiled (K reduction grid axis).
    """
    rows, K = x.shape
    Kw, M = w.shape
    assert Kw == K
    fuse_ln = ln is not None
    has_res = residual is not None

    # Row tiling (sublane multiple of 8).
    tm = min(256, _round_up(rows, 8))
    rows_pad = _round_up(rows, tm)

    # Output tiling (lane multiple of 128, lane-dense stores).
    M_pad = _round_up(M, 128)
    tn = max(t for t in (512, 384, 256, 128) if M_pad % t == 0)

    # Contraction tiling.
    if fuse_ln:
        K_pad, tk = K, K            # full-K block so LN statistics are exact
    else:
        K_pad = _round_up(K, 128)
        tk = max(t for t in (512, 384, 256, 128) if K_pad % t == 0)

    xp = jnp.pad(x, ((0, rows_pad - rows), (0, K_pad - K)))
    wp = jnp.pad(w, ((0, K_pad - K), (0, M_pad - M)))
    bp = jnp.pad(b, (0, M_pad - M)).reshape(1, M_pad)

    in_specs = [
        pl.BlockSpec((tm, tk), lambda i, j, k: (i, k)),
        pl.BlockSpec((tk, tn), lambda i, j, k: (k, j)),
        pl.BlockSpec((1, tn), lambda i, j, k: (0, j)),
    ]
    operands = [xp, wp, bp]
    if fuse_ln:
        in_specs += [pl.BlockSpec((1, K), lambda i, j, k: (0, 0)),
                     pl.BlockSpec((1, K), lambda i, j, k: (0, 0))]
        operands += [ln[0].reshape(1, K), ln[1].reshape(1, K)]
    if has_res:
        in_specs.append(pl.BlockSpec((tm, tn), lambda i, j, k: (i, j)))
        operands.append(jnp.pad(residual, ((0, rows_pad - rows), (0, M_pad - M))))

    kern = functools.partial(_matmul_kernel, fuse_ln=fuse_ln, has_res=has_res,
                             activation=activation, eps=eps)
    out = pl.pallas_call(
        kern,
        out_shape=jax.ShapeDtypeStruct((rows_pad, M_pad), jnp.float32),
        grid=(rows_pad // tm, M_pad // tn, K_pad // tk),
        in_specs=in_specs,
        out_specs=pl.BlockSpec((tm, tn), lambda i, j, k: (i, j)),
        scratch_shapes=[pltpu.VMEM((tm, tn), jnp.float32)],
        compiler_params=pltpu.CompilerParams(
            dimension_semantics=("parallel", "parallel", "arbitrary")),
    )(*operands)
    return out[:rows, :M]


# ---------------------------------------------------------------------------
# Row-tiled LayerNorm (used only for pre_layrnorm; other LNs are fused above).
# ---------------------------------------------------------------------------

def _layernorm_kernel(x_ref, g_ref, b_ref, o_ref, *, eps):
    x = x_ref[...]
    mean = jnp.mean(x, axis=-1, keepdims=True)
    var = jnp.mean(jnp.square(x - mean), axis=-1, keepdims=True)
    y = (x - mean) * jax.lax.rsqrt(var + eps)
    o_ref[...] = (y * g_ref[...] + b_ref[...]).astype(o_ref.dtype)


def layernorm(x, gamma, beta, eps=1e-5):
    rows, D = x.shape
    tr = min(256, _round_up(rows, 8))
    rows_pad = _round_up(rows, tr)
    xp = jnp.pad(x, ((0, rows_pad - rows), (0, 0)))
    out = pl.pallas_call(
        functools.partial(_layernorm_kernel, eps=eps),
        out_shape=jax.ShapeDtypeStruct((rows_pad, D), x.dtype),
        grid=(rows_pad // tr,),
        in_specs=[pl.BlockSpec((tr, D), lambda i: (i, 0)),
                  pl.BlockSpec((1, D), lambda i: (0, 0)),
                  pl.BlockSpec((1, D), lambda i: (0, 0))],
        out_specs=pl.BlockSpec((tr, D), lambda i: (i, 0)),
        compiler_params=pltpu.CompilerParams(dimension_semantics=("parallel",)),
    )(xp, gamma.reshape(1, D), beta.reshape(1, D))
    return out[:rows]


# ---------------------------------------------------------------------------
# Flash-style attention: online softmax over kv tiles, no (BH, S, S) scores.
# ---------------------------------------------------------------------------

def _flash_attn_kernel(q_ref, k_ref, v_ref, o_ref, m_sc, l_sc, acc_sc, *,
                       scale, s_valid, tkv):
    ki = pl.program_id(2)

    @pl.when(ki == 0)
    def _():
        m_sc[...] = jnp.full_like(m_sc, -1e30)
        l_sc[...] = jnp.zeros_like(l_sc)
        acc_sc[...] = jnp.zeros_like(acc_sc)

    q = (q_ref[0].astype(jnp.float32) * scale).astype(jnp.bfloat16)
    k = k_ref[0].astype(jnp.bfloat16)
    # q @ k^T via dot_general (contract last dims) -> (tq, tkv), f32 accumulation.
    s = jax.lax.dot_general(q, k, (((1,), (1,)), ((), ())),
                            preferred_element_type=jnp.float32)
    kv_pos = ki * tkv + jax.lax.broadcasted_iota(jnp.int32, s.shape, 1)
    s = jnp.where(kv_pos < s_valid, s, -1e30)          # mask padded kv positions

    m_prev = m_sc[...]
    m_new = jnp.maximum(m_prev, jnp.max(s, axis=-1, keepdims=True))
    alpha = jnp.exp(m_prev - m_new)
    p = jnp.exp(s - m_new)
    l_sc[...] = alpha * l_sc[...] + jnp.sum(p, axis=-1, keepdims=True)
    acc_sc[...] = alpha * acc_sc[...] + jnp.dot(
        p.astype(jnp.bfloat16), v_ref[0].astype(jnp.bfloat16),
        preferred_element_type=jnp.float32)
    m_sc[...] = m_new

    @pl.when(ki == pl.num_programs(2) - 1)
    def _():
        inv = pl.reciprocal(l_sc[...], approx=True)     # EUP slot, not a VPU divide
        o_ref[0] = (acc_sc[...] * inv).astype(o_ref.dtype)


def flash_attention(q, k, v, scale):
    """q, k, v: (BH, S, Dh) -> softmax(q k^T * scale) v, same shape."""
    BH, S, Dh = q.shape
    t = min(128, _round_up(S, 8))
    S_pad = _round_up(S, t)
    Dh_pad = _round_up(max(Dh, 128), 128)               # lane-dense head dim

    def pad3(a):
        return jnp.pad(a, ((0, 0), (0, S_pad - S), (0, Dh_pad - Dh)))

    spec_q = pl.BlockSpec((1, t, Dh_pad), lambda b, qi, ki: (b, qi, 0))
    spec_kv = pl.BlockSpec((1, t, Dh_pad), lambda b, qi, ki: (b, ki, 0))
    out = pl.pallas_call(
        functools.partial(_flash_attn_kernel, scale=scale, s_valid=S, tkv=t),
        out_shape=jax.ShapeDtypeStruct((BH, S_pad, Dh_pad), q.dtype),
        grid=(BH, S_pad // t, S_pad // t),
        in_specs=[spec_q, spec_kv, spec_kv],
        out_specs=spec_q,
        scratch_shapes=[pltpu.VMEM((t, 1), jnp.float32),
                        pltpu.VMEM((t, 1), jnp.float32),
                        pltpu.VMEM((t, Dh_pad), jnp.float32)],
        compiler_params=pltpu.CompilerParams(
            dimension_semantics=("parallel", "parallel", "arbitrary")),
    )(pad3(q), pad3(k), pad3(v))
    return out[:, :S, :Dh]


# ---------------------------------------------------------------------------
# Parameter init (deterministic, synthetic).  Matmul weights in bf16, rest f32.
# Per-layer params are stacked along a leading L axis for lax.scan.
# ---------------------------------------------------------------------------

def init_params(key, cfg):
    C, P, D, I, L = (cfg["channels"], cfg["patch_size"], cfg["hidden"],
                     cfg["intermediate"], cfg["layers"])
    num_pos = (cfg["image_size"] // P) ** 2 + 1
    std = 0.02
    keys = jax.random.split(key, 8)

    def nrm(k, shape, dtype=jnp.float32):
        return (std * jax.random.normal(k, shape, jnp.float32)).astype(dtype)

    return {
        "patch_embed_w": nrm(keys[0], (D, C, P, P)),     # conv (out, in, kh, kw), no bias
        "class_embed": nrm(keys[1], (D,)),
        "pos_embed": nrm(keys[2], (num_pos, D)),
        "pre_ln_g": jnp.ones((D,), jnp.float32), "pre_ln_b": jnp.zeros((D,), jnp.float32),
        "post_ln_g": jnp.ones((D,), jnp.float32), "post_ln_b": jnp.zeros((D,), jnp.float32),
        "layers": {
            "ln1_g": jnp.ones((L, D), jnp.float32), "ln1_b": jnp.zeros((L, D), jnp.float32),
            "qkv_w": nrm(keys[3], (L, D, 3 * D), jnp.bfloat16),   # fused q/k/v projection
            "qkv_b": nrm(keys[4], (L, 3 * D)),
            "o_w": nrm(keys[5], (L, D, D), jnp.bfloat16),
            "o_b": nrm(keys[6], (L, D)),
            "ln2_g": jnp.ones((L, D), jnp.float32), "ln2_b": jnp.zeros((L, D), jnp.float32),
            "fc1_w": nrm(keys[7], (L, D, I), jnp.bfloat16),
            "fc1_b": jnp.zeros((L, I), jnp.float32),
            "fc2_w": nrm(jax.random.fold_in(key, 99), (L, I, D), jnp.bfloat16),
            "fc2_b": jnp.zeros((L, D), jnp.float32),
        },
    }


# ---------------------------------------------------------------------------
# Forward pass (CLIPVisionTransformer, return_dict=False semantics).
# ---------------------------------------------------------------------------

def clip_vision_forward(pixel_values, params, cfg):
    B, C, H, W = pixel_values.shape
    P, D = cfg["patch_size"], cfg["hidden"]
    Hp, Wp = H // P, W // P
    num_patches = Hp * Wp
    S = num_patches + 1
    nH = cfg["heads"]
    Dh = D // nH
    scale = Dh ** -0.5
    N = B * S

    # Patch-embed conv (stride == kernel == patch) as a GEMM over flattened patches.
    patches = pixel_values.reshape(B, C, Hp, P, Wp, P)
    patches = patches.transpose(0, 2, 4, 1, 3, 5).reshape(B * num_patches, C * P * P)
    conv_w = params["patch_embed_w"].reshape(D, C * P * P).T.astype(jnp.bfloat16)
    zero_bias = jnp.zeros((D,), jnp.float32)
    patch_emb = matmul_bias(patches, conv_w, zero_bias).reshape(B, num_patches, D)

    cls = jnp.broadcast_to(params["class_embed"].reshape(1, 1, D), (B, 1, D))
    h = jnp.concatenate([cls, patch_emb], axis=1) + params["pos_embed"][None, :S, :]
    h = h.reshape(N, D)

    # pre_layrnorm (feeds the residual stream, so it stays a standalone tiled LN).
    h = layernorm(h, params["pre_ln_g"], params["pre_ln_b"])

    def to_heads(t):
        return t.reshape(B, S, nH, Dh).transpose(0, 2, 1, 3).reshape(B * nH, S, Dh)

    def from_heads(t):
        return t.reshape(B, nH, S, Dh).transpose(0, 2, 1, 3).reshape(N, D)

    def layer_fn(h, lyr):
        # LN1 fused into the single wide QKV GEMM.
        qkv = matmul_bias(h, lyr["qkv_w"], lyr["qkv_b"],
                          ln=(lyr["ln1_g"], lyr["ln1_b"]))
        q, k, v = qkv[:, :D], qkv[:, D:2 * D], qkv[:, 2 * D:]
        attn = flash_attention(to_heads(q), to_heads(k), to_heads(v), scale)
        # o-proj with fused residual add.
        h = matmul_bias(from_heads(attn), lyr["o_w"], lyr["o_b"], residual=h)
        # LN2 fused into FC1 (+quick_gelu); FC2 with fused residual add.
        x = matmul_bias(h, lyr["fc1_w"], lyr["fc1_b"],
                        ln=(lyr["ln2_g"], lyr["ln2_b"]), activation="quick_gelu")
        h = matmul_bias(x, lyr["fc2_w"], lyr["fc2_b"], residual=h)
        return h, None

    h, _ = jax.lax.scan(layer_fn, h, params["layers"])

    last_hidden_state = h.reshape(B, S, D)
    pooled = last_hidden_state[:, 0, :]
    # post_layernorm on a tiny (B, D) slice: plain JAX (a dedicated kernel is pure launch overhead).
    mean = jnp.mean(pooled, axis=-1, keepdims=True)
    var = jnp.mean(jnp.square(pooled - mean), axis=-1, keepdims=True)
    pooled = (pooled - mean) * jax.lax.rsqrt(var + 1e-5)
    pooled = pooled * params["post_ln_g"] + params["post_ln_b"]
    return last_hidden_state, pooled


# ---------------------------------------------------------------------------

if __name__ == "__main__":
    cfg = dict(
        image_size=16,
        patch_size=8,
        channels=3,
        hidden=32,
        heads=4,
        intermediate=64,
        layers=2,
    )

    key = jax.random.PRNGKey(0)
    k_params, k_input = jax.random.split(key)
    params = init_params(k_params, cfg)
    pixel_values = jax.random.normal(
        k_input, (2, cfg["channels"], cfg["image_size"], cfg["image_size"]), jnp.float32
    )

    fwd = jax.jit(lambda pv, pr: clip_vision_forward(pv, pr, cfg))
    last_hidden_state, pooled_output = fwd(pixel_values, params)
    jax.block_until_ready((last_hidden_state, pooled_output))

    num_patches = (cfg["image_size"] // cfg["patch_size"]) ** 2
    assert last_hidden_state.shape == (2, num_patches + 1, cfg["hidden"])
    assert pooled_output.shape == (2, cfg["hidden"])
    assert jnp.all(jnp.isfinite(last_hidden_state)) and jnp.all(jnp.isfinite(pooled_output))

    print("KERNEL_OK")
</pallas_src>

<mosaic_0001>
module attributes {stable_mosaic.version = 11 : i64} {
  func.func @_layernorm_kernel(%arg0: i32, %arg1: memref<16x32xf32, #tpu.memory_space<vmem>>, %arg2: memref<1x32xf32, #tpu.memory_space<vmem>>, %arg3: memref<1x32xf32, #tpu.memory_space<vmem>>, %arg4: memref<16x32xf32, #tpu.memory_space<vmem>>) attributes {dimension_semantics = [#tpu.dimension_semantics<parallel>], iteration_bounds = array<i64: 1>, scalar_prefetch = 0 : i64, scratch_operands = 0 : i64, tpu.core_type = #tpu.core_type<tc>, window_params = [{transform_indices = @transform_0, window_bounds = array<i64: 16, 32>}, {pipeline_mode = #tpu.pipeline_mode<synchronous>, transform_indices = @transform_1, window_bounds = array<i64: 1, 32>}, {pipeline_mode = #tpu.pipeline_mode<synchronous>, transform_indices = @transform_2, window_bounds = array<i64: 1, 32>}, {transform_indices = @transform_3, window_bounds = array<i64: 16, 32>}]} {
    %c0 = arith.constant 0 : index
    %c0_0 = arith.constant 0 : index
    %0 = vector.load %arg1[%c0, %c0_0] : memref<16x32xf32, #tpu.memory_space<vmem>>, vector<16x32xf32>
    %cst = arith.constant dense<0.000000e+00> : vector<16xf32>
    %1 = vector.multi_reduction <add>, %0, %cst [1] : vector<16x32xf32> to vector<16xf32>
    %2 = vector.shape_cast %1 : vector<16xf32> to vector<16x1xf32>
    %cst_1 = arith.constant 3.200000e+01 : f32
    %3 = vector.broadcast %cst_1 : f32 to vector<16x1xf32>
    %4 = arith.divf %2, %3 : vector<16x1xf32>
    %5 = vector.broadcast %4 : vector<16x1xf32> to vector<16x32xf32>
    %6 = arith.subf %0, %5 : vector<16x32xf32>
    %7 = arith.mulf %6, %6 : vector<16x32xf32>
    %cst_2 = arith.constant dense<0.000000e+00> : vector<16xf32>
    %8 = vector.multi_reduction <add>, %7, %cst_2 [1] : vector<16x32xf32> to vector<16xf32>
    %9 = vector.shape_cast %8 : vector<16xf32> to vector<16x1xf32>
    %cst_3 = arith.constant 3.200000e+01 : f32
    %10 = vector.broadcast %cst_3 : f32 to vector<16x1xf32>
    %11 = arith.divf %9, %10 : vector<16x1xf32>
    %12 = vector.broadcast %4 : vector<16x1xf32> to vector<16x32xf32>
    %13 = arith.subf %0, %12 : vector<16x32xf32>
    %cst_4 = arith.constant 9.99999974E-6 : f32
    %14 = vector.broadcast %cst_4 : f32 to vector<16x1xf32>
    %15 = arith.addf %11, %14 : vector<16x1xf32>
    %16 = math.rsqrt %15 : vector<16x1xf32>
    %17 = vector.broadcast %16 : vector<16x1xf32> to vector<16x32xf32>
    %18 = arith.mulf %13, %17 : vector<16x32xf32>
    %c0_5 = arith.constant 0 : index
    %c0_6 = arith.constant 0 : index
    %19 = vector.load %arg2[%c0_5, %c0_6] : memref<1x32xf32, #tpu.memory_space<vmem>>, vector<1x32xf32>
    %20 = vector.broadcast %19 : vector<1x32xf32> to vector<16x32xf32>
    %21 = arith.mulf %18, %20 : vector<16x32xf32>
    %c0_7 = arith.constant 0 : index
    %c0_8 = arith.constant 0 : index
    %22 = vector.load %arg3[%c0_7, %c0_8] : memref<1x32xf32, #tpu.memory_space<vmem>>, vector<1x32xf32>
    %23 = vector.broadcast %22 : vector<1x32xf32> to vector<16x32xf32>
    %24 = arith.addf %21, %23 : vector<16x32xf32>
    %c0_9 = arith.constant 0 : index
    %c0_10 = arith.constant 0 : index
    %25 = vector.load %arg4[%c0_9, %c0_10] : memref<16x32xf32, #tpu.memory_space<vmem>>, vector<16x32xf32>
    tpu.vector_store %arg4[%c0_9, %c0_10], %24 {strides = array<i32>} : memref<16x32xf32, #tpu.memory_space<vmem>>, vector<16x32xf32>,
    return
  }
  func.func @transform_0(%arg0: i32) -> (i32, i32) {
    %c0_i32 = arith.constant 0 : i32
    %c0_i32_0 = arith.constant 0 : i32
    return %arg0, %c0_i32 : i32, i32
  }
  func.func @transform_1(%arg0: i32) -> (i32, i32) {
    %c0_i32 = arith.constant 0 : i32
    %c0_i32_0 = arith.constant 0 : i32
    %c0_i32_1 = arith.constant 0 : i32
    return %c0_i32, %c0_i32_0 : i32, i32
  }
  func.func @transform_2(%arg0: i32) -> (i32, i32) {
    %c0_i32 = arith.constant 0 : i32
    %c0_i32_0 = arith.constant 0 : i32
    %c0_i32_1 = arith.constant 0 : i32
    return %c0_i32, %c0_i32_0 : i32, i32
  }
  func.func @transform_3(%arg0: i32) -> (i32, i32) {
    %c0_i32 = arith.constant 0 : i32
    %c0_i32_0 = arith.constant 0 : i32
    return %arg0, %c0_i32 : i32, i32
  }
}

module attributes {stable_mosaic.version = 11 : i64} {
  func.func @_matmul_kernel(%arg0: i32, %arg1: i32, %arg2: i32, %arg3: memref<8x256xf32, #tpu.memory_space<vmem>>, %arg4: memref<256x128xbf16, #tpu.memory_space<vmem>>, %arg5: memref<1x128xf32, #tpu.memory_space<vmem>>, %arg6: memref<8x128xf32, #tpu.memory_space<vmem>>, %arg7: memref<8x128xf32, #tpu.memory_space<vmem>>) attributes {dimension_semantics = [#tpu.dimension_semantics<parallel>, #tpu.dimension_semantics<parallel>, #tpu.dimension_semantics<arbitrary>], iteration_bounds = array<i64: 1, 1, 1>, scalar_prefetch = 0 : i64, scratch_operands = 1 : i64, tpu.core_type = #tpu.core_type<tc>, window_params = [{transform_indices = @transform_0, window_bounds = array<i64: 8, 256>}, {transform_indices = @transform_1, window_bounds = array<i64: 256, 128>}, {transform_indices = @transform_2, window_bounds = array<i64: 1, 128>}, {transform_indices = @transform_3, window_bounds = array<i64: 8, 128>}]} {
    %c0_i32 = arith.constant 0 : i32
    %0 = arith.cmpi eq, %arg2, %c0_i32 : i32
    %1 = arith.extui %0 : i1 to i32
    %c0_i32_0 = arith.constant 0 : i32
    %2 = arith.cmpi ne, %1, %c0_i32_0 : i32
    scf.if %2 {
      %cst_10 = arith.constant 0.000000e+00 : f32
      %13 = vector.broadcast %cst_10 : f32 to vector<8x128xf32>
      %c0_11 = arith.constant 0 : index
      %c0_12 = arith.constant 0 : index
      %14 = vector.load %arg7[%c0_11, %c0_12] : memref<8x128xf32, #tpu.memory_space<vmem>>, vector<8x128xf32>
      tpu.vector_store %arg7[%c0_11, %c0_12], %13 {strides = array<i32>} : memref<8x128xf32, #tpu.memory_space<vmem>>, vector<8x128xf32>,
    } else {
    }
    %c0 = arith.constant 0 : index
    %c0_1 = arith.constant 0 : index
    %3 = vector.load %arg3[%c0, %c0_1] : memref<8x256xf32, #tpu.memory_space<vmem>>, vector<8x256xf32>
    %4 = arith.truncf %3 : vector<8x256xf32> to vector<8x256xbf16>
    %c0_2 = arith.constant 0 : index
    %c0_3 = arith.constant 0 : index
    %5 = vector.load %arg7[%c0_2, %c0_3] : memref<8x128xf32, #tpu.memory_space<vmem>>, vector<8x128xf32>
    %c0_4 = arith.constant 0 : index
    %c0_5 = arith.constant 0 : index
    %6 = vector.load %arg4[%c0_4, %c0_5] : memref<256x128xbf16, #tpu.memory_space<vmem>>, vector<256x128xbf16>
    %cst = arith.constant dense<0.000000e+00> : vector<8x128xf32>
    %7 = tpu.matmul %4, %6, %cst {dimension_numbers = #tpu.dot_dimension_numbers<[1], [0], [0], [1], [0, 0, 1, 1], [], []>} : vector<8x256xbf16>, vector<256x128xbf16>, vector<8x128xf32> -> vector<8x128xf32>
    %8 = arith.addf %5, %7 : vector<8x128xf32>
    %c0_6 = arith.constant 0 : index
    %c0_7 = arith.constant 0 : index
    %9 = vector.load %arg7[%c0_6, %c0_7] : memref<8x128xf32, #tpu.memory_space<vmem>>, vector<8x128xf32>
    tpu.vector_store %arg7[%c0_6, %c0_7], %8 {strides = array<i32>} : memref<8x128xf32, #tpu.memory_space<vmem>>, vector<8x128xf32>,
    %c0_i32_8 = arith.constant 0 : i32
    %10 = arith.cmpi eq, %arg2, %c0_i32_8 : i32
    %11 = arith.extui %10 : i1 to i32
    %c0_i32_9 = arith.constant 0 : i32
    %12 = arith.cmpi ne, %11, %c0_i32_9 : i32
    scf.if %12 {
      %c0_10 = arith.constant 0 : index
      %c0_11 = arith.constant 0 : index
      %13 = vector.load %arg7[%c0_10, %c0_11] : memref<8x128xf32, #tpu.memory_space<vmem>>, vector<8x128xf32>
      %c0_12 = arith.constant 0 : index
      %c0_13 = arith.constant 0 : index
      %14 = vector.load %arg5[%c0_12, %c0_13] : memref<1x128xf32, #tpu.memory_space<vmem>>, vector<1x128xf32>
      %15 = vector.broadcast %14 : vector<1x128xf32> to vector<8x128xf32>
      %16 = arith.addf %13, %15 : vector<8x128xf32>
      %c0_14 = arith.constant 0 : index
      %c0_15 = arith.constant 0 : index
      %17 = vector.load %arg6[%c0_14, %c0_15] : memref<8x128xf32, #tpu.memory_space<vmem>>, vector<8x128xf32>
      tpu.vector_store %arg6[%c0_14, %c0_15], %16 {strides = array<i32>} : memref<8x128xf32, #tpu.memory_space<vmem>>, vector<8x128xf32>,
    } else {
    }
    return
  }
  func.func @transform_0(%arg0: i32, %arg1: i32, %arg2: i32) -> (i32, i32) {
    %c0_i32 = arith.constant 0 : i32
    return %arg0, %arg2 : i32, i32
  }
  func.func @transform_1(%arg0: i32, %arg1: i32, %arg2: i32) -> (i32, i32) {
    %c0_i32 = arith.constant 0 : i32
    return %arg2, %arg1 : i32, i32
  }
  func.func @transform_2(%arg0: i32, %arg1: i32, %arg2: i32) -> (i32, i32) {
    %c0_i32 = arith.constant 0 : i32
    %c0_i32_0 = arith.constant 0 : i32
    return %c0_i32, %arg1 : i32, i32
  }
  func.func @transform_3(%arg0: i32, %arg1: i32, %arg2: i32) -> (i32, i32) {
    %c0_i32 = arith.constant 0 : i32
    return %arg0, %arg1 : i32, i32
  }
}

module attributes {stable_mosaic.version = 11 : i64} {
  func.func @_matmul_kernel(%arg0: i32, %arg1: i32, %arg2: i32, %arg3: memref<16x32xf32, #tpu.memory_space<vmem>>, %arg4: memref<32x128xbf16, #tpu.memory_space<vmem>>, %arg5: memref<1x128xf32, #tpu.memory_space<vmem>>, %arg6: memref<1x32xf32, #tpu.memory_space<vmem>>, %arg7: memref<1x32xf32, #tpu.memory_space<vmem>>, %arg8: memref<16x128xf32, #tpu.memory_space<vmem>>, %arg9: memref<16x128xf32, #tpu.memory_space<vmem>>) attributes {dimension_semantics = [#tpu.dimension_semantics<parallel>, #tpu.dimension_semantics<parallel>, #tpu.dimension_semantics<arbitrary>], iteration_bounds = array<i64: 1, 1, 1>, scalar_prefetch = 0 : i64, scratch_operands = 1 : i64, tpu.core_type = #tpu.core_type<tc>, window_params = [{transform_indices = @transform_0, window_bounds = array<i64: 16, 32>}, {transform_indices = @transform_1, window_bounds = array<i64: 32, 128>}, {transform_indices = @transform_2, window_bounds = array<i64: 1, 128>}, {pipeline_mode = #tpu.pipeline_mode<synchronous>, transform_indices = @transform_3, window_bounds = array<i64: 1, 32>}, {pipeline_mode = #tpu.pipeline_mode<synchronous>, transform_indices = @transform_4, window_bounds = array<i64: 1, 32>}, {transform_indices = @transform_5, window_bounds = array<i64: 16, 128>}]} {
    %c0_i32 = arith.constant 0 : i32
    %0 = arith.cmpi eq, %arg2, %c0_i32 : i32
    %1 = arith.extui %0 : i1 to i32
    %c0_i32_0 = arith.constant 0 : i32
    %2 = arith.cmpi ne, %1, %c0_i32_0 : i32
    scf.if %2 {
      %cst_19 = arith.constant 0.000000e+00 : f32
      %37 = vector.broadcast %cst_19 : f32 to vector<16x128xf32>
      %c0_20 = arith.constant 0 : index
      %c0_21 = arith.constant 0 : index
      %38 = vector.load %arg9[%c0_20, %c0_21] : memref<16x128xf32, #tpu.memory_space<vmem>>, vector<16x128xf32>
      tpu.vector_store %arg9[%c0_20, %c0_21], %37 {strides = array<i32>} : memref<16x128xf32, #tpu.memory_space<vmem>>, vector<16x128xf32>,
    } else {
    }
    %c0 = arith.constant 0 : index
    %c0_1 = arith.constant 0 : index
    %3 = vector.load %arg3[%c0, %c0_1] : memref<16x32xf32, #tpu.memory_space<vmem>>, vector<16x32xf32>
    %cst = arith.constant dense<0.000000e+00> : vector<16xf32>
    %4 = vector.multi_reduction <add>, %3, %cst [1] : vector<16x32xf32> to vector<16xf32>
    %5 = vector.shape_cast %4 : vector<16xf32> to vector<16x1xf32>
    %cst_2 = arith.constant 3.200000e+01 : f32
    %6 = vector.broadcast %cst_2 : f32 to vector<16x1xf32>
    %7 = arith.divf %5, %6 : vector<16x1xf32>
    %8 = vector.broadcast %7 : vector<16x1xf32> to vector<16x32xf32>
    %9 = arith.subf %3, %8 : vector<16x32xf32>
    %10 = arith.mulf %9, %9 : vector<16x32xf32>
    %cst_3 = arith.constant dense<0.000000e+00> : vector<16xf32>
    %11 = vector.multi_reduction <add>, %10, %cst_3 [1] : vector<16x32xf32> to vector<16xf32>
    %12 = vector.shape_cast %11 : vector<16xf32> to vector<16x1xf32>
    %cst_4 = arith.constant 3.200000e+01 : f32
    %13 = vector.broadcast %cst_4 : f32 to vector<16x1xf32>
    %14 = arith.divf %12, %13 : vector<16x1xf32>
    %15 = vector.broadcast %7 : vector<16x1xf32> to vector<16x32xf32>
    %16 = arith.subf %3, %15 : vector<16x32xf32>
    %cst_5 = arith.constant 9.99999974E-6 : f32
    %17 = vector.broadcast %cst_5 : f32 to vector<16x1xf32>
    %18 = arith.addf %14, %17 : vector<16x1xf32>
    %19 = math.rsqrt %18 : vector<16x1xf32>
    %20 = vector.broadcast %19 : vector<16x1xf32> to vector<16x32xf32>
    %21 = arith.mulf %16, %20 : vector<16x32xf32>
    %c0_6 = arith.constant 0 : index
    %c0_7 = arith.constant 0 : index
    %22 = vector.load %arg6[%c0_6, %c0_7] : memref<1x32xf32, #tpu.memory_space<vmem>>, vector<1x32xf32>
    %23 = vector.broadcast %22 : vector<1x32xf32> to vector<16x32xf32>
    %24 = arith.mulf %21, %23 : vector<16x32xf32>
    %c0_8 = arith.constant 0 : index
    %c0_9 = arith.constant 0 : index
    %25 = vector.load %arg7[%c0_8, %c0_9] : memref<1x32xf32, #tpu.memory_space<vmem>>, vector<1x32xf32>
    %26 = vector.broadcast %25 : vector<1x32xf32> to vector<16x32xf32>
    %27 = arith.addf %24, %26 : vector<16x32xf32>
    %28 = arith.truncf %27 : vector<16x32xf32> to vector<16x32xbf16>
    %c0_10 = arith.constant 0 : index
    %c0_11 = arith.constant 0 : index
    %29 = vector.load %arg9[%c0_10, %c0_11] : memref<16x128xf32, #tpu.memory_space<vmem>>, vector<16x128xf32>
    %c0_12 = arith.constant 0 : index
    %c0_13 = arith.constant 0 : index
    %30 = vector.load %arg4[%c0_12, %c0_13] : memref<32x128xbf16, #tpu.memory_space<vmem>>, vector<32x128xbf16>
    %cst_14 = arith.constant dense<0.000000e+00> : vector<16x128xf32>
    %31 = tpu.matmul %28, %30, %cst_14 {dimension_numbers = #tpu.dot_dimension_numbers<[1], [0], [0], [1], [0, 0, 1, 1], [], []>} : vector<16x32xbf16>, vector<32x128xbf16>, vector<16x128xf32> -> vector<16x128xf32>
    %32 = arith.addf %29, %31 : vector<16x128xf32>
    %c0_15 = arith.constant 0 : index
    %c0_16 = arith.constant 0 : index
    %33 = vector.load %arg9[%c0_15, %c0_16] : memref<16x128xf32, #tpu.memory_space<vmem>>, vector<16x128xf32>
    tpu.vector_store %arg9[%c0_15, %c0_16], %32 {strides = array<i32>} : memref<16x128xf32, #tpu.memory_space<vmem>>, vector<16x128xf32>,
    %c0_i32_17 = arith.constant 0 : i32
    %34 = arith.cmpi eq, %arg2, %c0_i32_17 : i32
    %35 = arith.extui %34 : i1 to i32
    %c0_i32_18 = arith.constant 0 : i32
    %36 = arith.cmpi ne, %35, %c0_i32_18 : i32
    scf.if %36 {
      %c0_19 = arith.constant 0 : index
      %c0_20 = arith.constant 0 : index
      %37 = vector.load %arg9[%c0_19, %c0_20] : memref<16x128xf32, #tpu.memory_space<vmem>>, vector<16x128xf32>
      %c0_21 = arith.constant 0 : index
      %c0_22 = arith.constant 0 : index
      %38 = vector.load %arg5[%c0_21, %c0_22] : memref<1x128xf32, #tpu.memory_space<vmem>>, vector<1x128xf32>
      %39 = vector.broadcast %38 : vector<1x128xf32> to vector<16x128xf32>
      %40 = arith.addf %37, %39 : vector<16x128xf32>
      %c0_23 = arith.constant 0 : index
      %c0_24 = arith.constant 0 : index
      %41 = vector.load %arg8[%c0_23, %c0_24] : memref<16x128xf32, #tpu.memory_space<vmem>>, vector<16x128xf32>
      tpu.vector_store %arg8[%c0_23, %c0_24], %40 {strides = array<i32>} : memref<16x128xf32, #tpu.memory_space<vmem>>, vector<16x128xf32>,
    } else {
    }
    return
  }
  func.func @transform_0(%arg0: i32, %arg1: i32, %arg2: i32) -> (i32, i32) {
    %c0_i32 = arith.constant 0 : i32
    return %arg0, %arg2 : i32, i32
  }
  func.func @transform_1(%arg0: i32, %arg1: i32, %arg2: i32) -> (i32, i32) {
    %c0_i32 = arith.constant 0 : i32
    return %arg2, %arg1 : i32, i32
  }
  func.func @transform_2(%arg0: i32, %arg1: i32, %arg2: i32) -> (i32, i32) {
    %c0_i32 = arith.constant 0 : i32
    %c0_i32_0 = arith.constant 0 : i32
    return %c0_i32, %arg1 : i32, i32
  }
  func.func @transform_3(%arg0: i32, %arg1: i32, %arg2: i32) -> (i32, i32) {
    %c0_i32 = arith.constant 0 : i32
    %c0_i32_0 = arith.constant 0 : i32
    %c0_i32_1 = arith.constant 0 : i32
    return %c0_i32, %c0_i32_0 : i32, i32
  }
  func.func @transform_4(%arg0: i32, %arg1: i32, %arg2: i32) -> (i32, i32) {
    %c0_i32 = arith.constant 0 : i32
    %c0_i32_0 = arith.constant 0 : i32
    %c0_i32_1 = arith.constant 0 : i32
    return %c0_i32, %c0_i32_0 : i32, i32
  }
  func.func @transform_5(%arg0: i32, %arg1: i32, %arg2: i32) -> (i32, i32) {
    %c0_i32 = arith.constant 0 : i32
    return %arg0, %arg1 : i32, i32
  }
}

module attributes {stable_mosaic.version = 11 : i64} {
  func.func @_flash_attn_kernel(%arg0: i32, %arg1: i32, %arg2: i32, %arg3: memref<1x8x128xf32, #tpu.memory_space<vmem>>, %arg4: memref<1x8x128xf32, #tpu.memory_space<vmem>>, %arg5: memref<1x8x128xf32, #tpu.memory_space<vmem>>, %arg6: memref<1x8x128xf32, #tpu.memory_space<vmem>>, %arg7: memref<8x1xf32, #tpu.memory_space<vmem>>, %arg8: memref<8x1xf32, #tpu.memory_space<vmem>>, %arg9: memref<8x128xf32, #tpu.memory_space<vmem>>) attributes {dimension_semantics = [#tpu.dimension_semantics<parallel>, #tpu.dimension_semantics<parallel>, #tpu.dimension_semantics<arbitrary>], iteration_bounds = array<i64: 8, 1, 1>, scalar_prefetch = 0 : i64, scratch_operands = 3 : i64, tpu.core_type = #tpu.core_type<tc>, window_params = [{transform_indices = @transform_0, window_bounds = array<i64: 1, 8, 128>}, {transform_indices = @transform_1, window_bounds = array<i64: 1, 8, 128>}, {transform_indices = @transform_2, window_bounds = array<i64: 1, 8, 128>}, {transform_indices = @transform_3, window_bounds = array<i64: 1, 8, 128>}]} {
    %c0_i32 = arith.constant 0 : i32
    %0 = arith.cmpi eq, %arg2, %c0_i32 : i32
    %1 = arith.extui %0 : i1 to i32
    %c0_i32_0 = arith.constant 0 : i32
    %2 = arith.cmpi ne, %1, %c0_i32_0 : i32
    scf.if %2 {
      %cst_28 = arith.constant -1.000000e+30 : f32
      %49 = vector.broadcast %cst_28 : f32 to vector<8x1xf32>
      %c0_29 = arith.constant 0 : index
      %c0_30 = arith.constant 0 : index
      %50 = vector.load %arg7[%c0_29, %c0_30] : memref<8x1xf32, #tpu.memory_space<vmem>>, vector<8x1xf32>
      tpu.vector_store %arg7[%c0_29, %c0_30], %49 {strides = array<i32>} : memref<8x1xf32, #tpu.memory_space<vmem>>, vector<8x1xf32>,
      %cst_31 = arith.constant 0.000000e+00 : f32
      %51 = vector.broadcast %cst_31 : f32 to vector<8x1xf32>
      %c0_32 = arith.constant 0 : index
      %c0_33 = arith.constant 0 : index
      %52 = vector.load %arg8[%c0_32, %c0_33] : memref<8x1xf32, #tpu.memory_space<vmem>>, vector<8x1xf32>
      tpu.vector_store %arg8[%c0_32, %c0_33], %51 {strides = array<i32>} : memref<8x1xf32, #tpu.memory_space<vmem>>, vector<8x1xf32>,
      %cst_34 = arith.constant 0.000000e+00 : f32
      %53 = vector.broadcast %cst_34 : f32 to vector<8x128xf32>
      %c0_35 = arith.constant 0 : index
      %c0_36 = arith.constant 0 : index
      %54 = vector.load %arg9[%c0_35, %c0_36] : memref<8x128xf32, #tpu.memory_space<vmem>>, vector<8x128xf32>
      tpu.vector_store %arg9[%c0_35, %c0_36], %53 {strides = array<i32>} : memref<8x128xf32, #tpu.memory_space<vmem>>, vector<8x128xf32>,
    } else {
    }
    %c0 = arith.constant 0 : index
    %c0_1 = arith.constant 0 : index
    %c0_2 = arith.constant 0 : index
    %3 = vector.load %arg3[%c0, %c0_1, %c0_2] : memref<1x8x128xf32, #tpu.memory_space<vmem>>, vector<1x8x128xf32>
    %4 = vector.shape_cast %3 : vector<1x8x128xf32> to vector<8x128xf32>
    %cst = arith.constant 0.353553385 : f32
    %5 = vector.broadcast %cst : f32 to vector<8x128xf32>
    %6 = arith.mulf %4, %5 : vector<8x128xf32>
    %7 = arith.truncf %6 : vector<8x128xf32> to vector<8x128xbf16>
    %c0_3 = arith.constant 0 : index
    %c0_4 = arith.constant 0 : index
    %c0_5 = arith.constant 0 : index
    %8 = vector.load %arg4[%c0_3, %c0_4, %c0_5] : memref<1x8x128xf32, #tpu.memory_space<vmem>>, vector<1x8x128xf32>
    %9 = vector.shape_cast %8 : vector<1x8x128xf32> to vector<8x128xf32>
    %10 = arith.truncf %9 : vector<8x128xf32> to vector<8x128xbf16>
    %cst_6 = arith.constant dense<0.000000e+00> : vector<8x8xf32>
    %11 = tpu.matmul %7, %10, %cst_6 {dimension_numbers = #tpu.dot_dimension_numbers<[1], [1], [0], [0], [0, 0, 1, 0], [], []>} : vector<8x128xbf16>, vector<8x128xbf16>, vector<8x8xf32> -> vector<8x8xf32>
    %c8_i32 = arith.constant 8 : i32
    %12 = arith.muli %arg2, %c8_i32 : i32
    %13 = tpu.iota {dimensions = array<i32: 1>} : vector<8x8xi32>
    %14 = vector.broadcast %12 : i32 to vector<8x8xi32>
    %15 = arith.addi %14, %13 : vector<8x8xi32>
    %c5_i32 = arith.constant 5 : i32
    %16 = vector.broadcast %c5_i32 : i32 to vector<8x8xi32>
    %17 = arith.cmpi slt, %15, %16 : vector<8x8xi32>
    %cst_7 = arith.constant -1.000000e+30 : f32
    %18 = vector.broadcast %cst_7 : f32 to vector<8x8xf32>
    %19 = arith.select %17, %11, %18 : vector<8x8xi1>, vector<8x8xf32>
    %c0_8 = arith.constant 0 : index
    %c0_9 = arith.constant 0 : index
    %20 = vector.load %arg7[%c0_8, %c0_9] : memref<8x1xf32, #tpu.memory_space<vmem>>, vector<8x1xf32>
    %cst_10 = arith.constant dense<0xFF800000> : vector<8xf32>
    %21 = vector.multi_reduction <maximumf>, %19, %cst_10 [1] : vector<8x8xf32> to vector<8xf32>
    %22 = vector.shape_cast %21 : vector<8xf32> to vector<8x1xf32>
    %23 = arith.maximumf %20, %22 : vector<8x1xf32>
    %24 = arith.subf %20, %23 : vector<8x1xf32>
    %25 = math.exp %24 : vector<8x1xf32>
    %26 = vector.broadcast %23 : vector<8x1xf32> to vector<8x8xf32>
    %27 = arith.subf %19, %26 : vector<8x8xf32>
    %28 = math.exp %27 : vector<8x8xf32>
    %c0_11 = arith.constant 0 : index
    %c0_12 = arith.constant 0 : index
    %29 = vector.load %arg8[%c0_11, %c0_12] : memref<8x1xf32, #tpu.memory_space<vmem>>, vector<8x1xf32>
    %30 = arith.mulf %25, %29 : vector<8x1xf32>
    %cst_13 = arith.constant dense<0.000000e+00> : vector<8xf32>
    %31 = vector.multi_reduction <add>, %28, %cst_13 [1] : vector<8x8xf32> to vector<8xf32>
    %32 = vector.shape_cast %31 : vector<8xf32> to vector<8x1xf32>
    %33 = arith.addf %30, %32 : vector<8x1xf32>
    %c0_14 = arith.constant 0 : index
    %c0_15 = arith.constant 0 : index
    %34 = vector.load %arg8[%c0_14, %c0_15] : memref<8x1xf32, #tpu.memory_space<vmem>>, vector<8x1xf32>
    tpu.vector_store %arg8[%c0_14, %c0_15], %33 {strides = array<i32>} : memref<8x1xf32, #tpu.memory_space<vmem>>, vector<8x1xf32>,
    %c0_16 = arith.constant 0 : index
    %c0_17 = arith.constant 0 : index
    %35 = vector.load %arg9[%c0_16, %c0_17] : memref<8x128xf32, #tpu.memory_space<vmem>>, vector<8x128xf32>
    %36 = vector.broadcast %25 : vector<8x1xf32> to vector<8x128xf32>
    %37 = arith.mulf %36, %35 : vector<8x128xf32>
    %38 = arith.truncf %28 : vector<8x8xf32> to vector<8x8xbf16>
    %c0_18 = arith.constant 0 : index
    %c0_19 = arith.constant 0 : index
    %c0_20 = arith.constant 0 : index
    %39 = vector.load %arg5[%c0_18, %c0_19, %c0_20] : memref<1x8x128xf32, #tpu.memory_space<vmem>>, vector<1x8x128xf32>
    %40 = vector.shape_cast %39 : vector<1x8x128xf32> to vector<8x128xf32>
    %41 = arith.truncf %40 : vector<8x128xf32> to vector<8x128xbf16>
    %cst_21 = arith.constant dense<0.000000e+00> : vector<8x128xf32>
    %42 = tpu.matmul %38, %41, %cst_21 {dimension_numbers = #tpu.dot_dimension_numbers<[1], [0], [0], [1], [0, 0, 1, 1], [], []>} : vector<8x8xbf16>, vector<8x128xbf16>, vector<8x128xf32> -> vector<8x128xf32>
    %43 = arith.addf %37, %42 : vector<8x128xf32>
    %c0_22 = arith.constant 0 : index
    %c0_23 = arith.constant 0 : index
    %44 = vector.load %arg9[%c0_22, %c0_23] : memref<8x128xf32, #tpu.memory_space<vmem>>, vector<8x128xf32>
    tpu.vector_store %arg9[%c0_22, %c0_23], %43 {strides = array<i32>} : memref<8x128xf32, #tpu.memory_space<vmem>>, vector<8x128xf32>,
    %c0_24 = arith.constant 0 : index
    %c0_25 = arith.constant 0 : index
    %45 = vector.load %arg7[%c0_24, %c0_25] : memref<8x1xf32, #tpu.memory_space<vmem>>, vector<8x1xf32>
    tpu.vector_store %arg7[%c0_24, %c0_25], %23 {strides = array<i32>} : memref<8x1xf32, #tpu.memory_space<vmem>>, vector<8x1xf32>,
    %c0_i32_26 = arith.constant 0 : i32
    %46 = arith.cmpi eq, %arg2, %c0_i32_26 : i32
    %47 = arith.extui %46 : i1 to i32
    %c0_i32_27 = arith.constant 0 : i32
    %48 = arith.cmpi ne, %47, %c0_i32_27 : i32
    scf.if %48 {
      %c0_28 = arith.constant 0 : index
      %c0_29 = arith.constant 0 : index
      %49 = vector.load %arg8[%c0_28, %c0_29] : memref<8x1xf32, #tpu.memory_space<vmem>>, vector<8x1xf32>
      %50 = tpu.reciprocal %49 {approx = true} : vector<8x1xf32> -> vector<8x1xf32>
      %c0_30 = arith.constant 0 : index
      %c0_31 = arith.constant 0 : index
      %51 = vector.load %arg9[%c0_30, %c0_31] : memref<8x128xf32, #tpu.memory_space<vmem>>, vector<8x128xf32>
      %52 = vector.broadcast %50 : vector<8x1xf32> to vector<8x128xf32>
      %53 = arith.mulf %51, %52 : vector<8x128xf32>
      %c0_32 = arith.constant 0 : index
      %c0_33 = arith.constant 0 : index
      %c0_34 = arith.constant 0 : index
      %54 = vector.load %arg6[%c0_32, %c0_33, %c0_34] : memref<1x8x128xf32, #tpu.memory_space<vmem>>, vector<1x8x128xf32>
      %55 = vector.shape_cast %54 : vector<1x8x128xf32> to vector<8x128xf32>
      %56 = vector.shape_cast %53 : vector<8x128xf32> to vector<1x8x128xf32>
      tpu.vector_store %arg6[%c0_32, %c0_33, %c0_34], %56 {strides = array<i32>} : memref<1x8x128xf32, #tpu.memory_space<vmem>>, vector<1x8x128xf32>,
    } else {
    }
    return
  }
  func.func @transform_0(%arg0: i32, %arg1: i32, %arg2: i32) -> (i32, i32, i32) {
    %c0_i32 = arith.constant 0 : i32
    %c0_i32_0 = arith.constant 0 : i32
    return %arg0, %arg1, %c0_i32 : i32, i32, i32
  }
  func.func @transform_1(%arg0: i32, %arg1: i32, %arg2: i32) -> (i32, i32, i32) {
    %c0_i32 = arith.constant 0 : i32
    %c0_i32_0 = arith.constant 0 : i32
    return %arg0, %arg2, %c0_i32 : i32, i32, i32
  }
  func.func @transform_2(%arg0: i32, %arg1: i32, %arg2: i32) -> (i32, i32, i32) {
    %c0_i32 = arith.constant 0 : i32
    %c0_i32_0 = arith.constant 0 : i32
    return %arg0, %arg2, %c0_i32 : i32, i32, i32
  }
  func.func @transform_3(%arg0: i32, %arg1: i32, %arg2: i32) -> (i32, i32, i32) {
    %c0_i32 = arith.constant 0 : i32
    %c0_i32_0 = arith.constant 0 : i32
    return %arg0, %arg1, %c0_i32 : i32, i32, i32
  }
}

module attributes {stable_mosaic.version = 11 : i64} {
  func.func @_matmul_kernel(%arg0: i32, %arg1: i32, %arg2: i32, %arg3: memref<16x128xf32, #tpu.memory_space<vmem>>, %arg4: memref<128x128xbf16, #tpu.memory_space<vmem>>, %arg5: memref<1x128xf32, #tpu.memory_space<vmem>>, %arg6: memref<16x128xf32, #tpu.memory_space<vmem>>, %arg7: memref<16x128xf32, #tpu.memory_space<vmem>>, %arg8: memref<16x128xf32, #tpu.memory_space<vmem>>) attributes {dimension_semantics = [#tpu.dimension_semantics<parallel>, #tpu.dimension_semantics<parallel>, #tpu.dimension_semantics<arbitrary>], iteration_bounds = array<i64: 1, 1, 1>, scalar_prefetch = 0 : i64, scratch_operands = 1 : i64, tpu.core_type = #tpu.core_type<tc>, window_params = [{transform_indices = @transform_0, window_bounds = array<i64: 16, 128>}, {transform_indices = @transform_1, window_bounds = array<i64: 128, 128>}, {transform_indices = @transform_2, window_bounds = array<i64: 1, 128>}, {transform_indices = @transform_3, window_bounds = array<i64: 16, 128>}, {transform_indices = @transform_4, window_bounds = array<i64: 16, 128>}]} {
    %c0_i32 = arith.constant 0 : i32
    %0 = arith.cmpi eq, %arg2, %c0_i32 : i32
    %1 = arith.extui %0 : i1 to i32
    %c0_i32_0 = arith.constant 0 : i32
    %2 = arith.cmpi ne, %1, %c0_i32_0 : i32
    scf.if %2 {
      %cst_10 = arith.constant 0.000000e+00 : f32
      %13 = vector.broadcast %cst_10 : f32 to vector<16x128xf32>
      %c0_11 = arith.constant 0 : index
      %c0_12 = arith.constant 0 : index
      %14 = vector.load %arg8[%c0_11, %c0_12] : memref<16x128xf32, #tpu.memory_space<vmem>>, vector<16x128xf32>
      tpu.vector_store %arg8[%c0_11, %c0_12], %13 {strides = array<i32>} : memref<16x128xf32, #tpu.memory_space<vmem>>, vector<16x128xf32>,
    } else {
    }
    %c0 = arith.constant 0 : index
    %c0_1 = arith.constant 0 : index
    %3 = vector.load %arg3[%c0, %c0_1] : memref<16x128xf32, #tpu.memory_space<vmem>>, vector<16x128xf32>
    %4 = arith.truncf %3 : vector<16x128xf32> to vector<16x128xbf16>
    %c0_2 = arith.constant 0 : index
    %c0_3 = arith.constant 0 : index
    %5 = vector.load %arg8[%c0_2, %c0_3] : memref<16x128xf32, #tpu.memory_space<vmem>>, vector<16x128xf32>
    %c0_4 = arith.constant 0 : index
    %c0_5 = arith.constant 0 : index
    %6 = vector.load %arg4[%c0_4, %c0_5] : memref<128x128xbf16, #tpu.memory_space<vmem>>, vector<128x128xbf16>
    %cst = arith.constant dense<0.000000e+00> : vector<16x128xf32>
    %7 = tpu.matmul %4, %6, %cst {dimension_numbers = #tpu.dot_dimension_numbers<[1], [0], [0], [1], [0, 0, 1, 1], [], []>} : vector<16x128xbf16>, vector<128x128xbf16>, vector<16x128xf32> -> vector<16x128xf32>
    %8 = arith.addf %5, %7 : vector<16x128xf32>
    %c0_6 = arith.constant 0 : index
    %c0_7 = arith.constant 0 : index
    %9 = vector.load %arg8[%c0_6, %c0_7] : memref<16x128xf32, #tpu.memory_space<vmem>>, vector<16x128xf32>
    tpu.vector_store %arg8[%c0_6, %c0_7], %8 {strides = array<i32>} : memref<16x128xf32, #tpu.memory_space<vmem>>, vector<16x128xf32>,
    %c0_i32_8 = arith.constant 0 : i32
    %10 = arith.cmpi eq, %arg2, %c0_i32_8 : i32
    %11 = arith.extui %10 : i1 to i32
    %c0_i32_9 = arith.constant 0 : i32
    %12 = arith.cmpi ne, %11, %c0_i32_9 : i32
    scf.if %12 {
      %c0_10 = arith.constant 0 : index
      %c0_11 = arith.constant 0 : index
      %13 = vector.load %arg8[%c0_10, %c0_11] : memref<16x128xf32, #tpu.memory_space<vmem>>, vector<16x128xf32>
      %c0_12 = arith.constant 0 : index
      %c0_13 = arith.constant 0 : index
      %14 = vector.load %arg5[%c0_12, %c0_13] : memref<1x128xf32, #tpu.memory_space<vmem>>, vector<1x128xf32>
      %15 = vector.broadcast %14 : vector<1x128xf32> to vector<16x128xf32>
      %16 = arith.addf %13, %15 : vector<16x128xf32>
      %c0_14 = arith.constant 0 : index
      %c0_15 = arith.constant 0 : index
      %17 = vector.load %arg6[%c0_14, %c0_15] : memref<16x128xf32, #tpu.memory_space<vmem>>, vector<16x128xf32>
      %18 = arith.addf %16, %17 : vector<16x128xf32>
      %c0_16 = arith.constant 0 : index
      %c0_17 = arith.constant 0 : index
      %19 = vector.load %arg7[%c0_16, %c0_17] : memref<16x128xf32, #tpu.memory_space<vmem>>, vector<16x128xf32>
      tpu.vector_store %arg7[%c0_16, %c0_17], %18 {strides = array<i32>} : memref<16x128xf32, #tpu.memory_space<vmem>>, vector<16x128xf32>,
    } else {
    }
    return
  }
  func.func @transform_0(%arg0: i32, %arg1: i32, %arg2: i32) -> (i32, i32) {
    %c0_i32 = arith.constant 0 : i32
    return %arg0, %arg2 : i32, i32
  }
  func.func @transform_1(%arg0: i32, %arg1: i32, %arg2: i32) -> (i32, i32) {
    %c0_i32 = arith.constant 0 : i32
    return %arg2, %arg1 : i32, i32
  }
  func.func @transform_2(%arg0: i32, %arg1: i32, %arg2: i32) -> (i32, i32) {
    %c0_i32 = arith.constant 0 : i32
    %c0_i32_0 = arith.constant 0 : i32
    return %c0_i32, %arg1 : i32, i32
  }
  func.func @transform_3(%arg0: i32, %arg1: i32, %arg2: i32) -> (i32, i32) {
    %c0_i32 = arith.constant 0 : i32
    return %arg0, %arg1 : i32, i32
  }
  func.func @transform_4(%arg0: i32, %arg1: i32, %arg2: i32) -> (i32, i32) {
    %c0_i32 = arith.constant 0 : i32
    return %arg0, %arg1 : i32, i32
  }
}

module attributes {stable_mosaic.version = 11 : i64} {
  func.func @_matmul_kernel(%arg0: i32, %arg1: i32, %arg2: i32, %arg3: memref<16x32xf32, #tpu.memory_space<vmem>>, %arg4: memref<32x128xbf16, #tpu.memory_space<vmem>>, %arg5: memref<1x128xf32, #tpu.memory_space<vmem>>, %arg6: memref<1x32xf32, #tpu.memory_space<vmem>>, %arg7: memref<1x32xf32, #tpu.memory_space<vmem>>, %arg8: memref<16x128xf32, #tpu.memory_space<vmem>>, %arg9: memref<16x128xf32, #tpu.memory_space<vmem>>) attributes {dimension_semantics = [#tpu.dimension_semantics<parallel>, #tpu.dimension_semantics<parallel>, #tpu.dimension_semantics<arbitrary>], iteration_bounds = array<i64: 1, 1, 1>, scalar_prefetch = 0 : i64, scratch_operands = 1 : i64, tpu.core_type = #tpu.core_type<tc>, window_params = [{transform_indices = @transform_0, window_bounds = array<i64: 16, 32>}, {transform_indices = @transform_1, window_bounds = array<i64: 32, 128>}, {transform_indices = @transform_2, window_bounds = array<i64: 1, 128>}, {pipeline_mode = #tpu.pipeline_mode<synchronous>, transform_indices = @transform_3, window_bounds = array<i64: 1, 32>}, {pipeline_mode = #tpu.pipeline_mode<synchronous>, transform_indices = @transform_4, window_bounds = array<i64: 1, 32>}, {transform_indices = @transform_5, window_bounds = array<i64: 16, 128>}]} {
    %c0_i32 = arith.constant 0 : i32
    %0 = arith.cmpi eq, %arg2, %c0_i32 : i32
    %1 = arith.extui %0 : i1 to i32
    %c0_i32_0 = arith.constant 0 : i32
    %2 = arith.cmpi ne, %1, %c0_i32_0 : i32
    scf.if %2 {
      %cst_19 = arith.constant 0.000000e+00 : f32
      %37 = vector.broadcast %cst_19 : f32 to vector<16x128xf32>
      %c0_20 = arith.constant 0 : index
      %c0_21 = arith.constant 0 : index
      %38 = vector.load %arg9[%c0_20, %c0_21] : memref<16x128xf32, #tpu.memory_space<vmem>>, vector<16x128xf32>
      tpu.vector_store %arg9[%c0_20, %c0_21], %37 {strides = array<i32>} : memref<16x128xf32, #tpu.memory_space<vmem>>, vector<16x128xf32>,
    } else {
    }
    %c0 = arith.constant 0 : index
    %c0_1 = arith.constant 0 : index
    %3 = vector.load %arg3[%c0, %c0_1] : memref<16x32xf32, #tpu.memory_space<vmem>>, vector<16x32xf32>
    %cst = arith.constant dense<0.000000e+00> : vector<16xf32>
    %4 = vector.multi_reduction <add>, %3, %cst [1] : vector<16x32xf32> to vector<16xf32>
    %5 = vector.shape_cast %4 : vector<16xf32> to vector<16x1xf32>
    %cst_2 = arith.constant 3.200000e+01 : f32
    %6 = vector.broadcast %cst_2 : f32 to vector<16x1xf32>
    %7 = arith.divf %5, %6 : vector<16x1xf32>
    %8 = vector.broadcast %7 : vector<16x1xf32> to vector<16x32xf32>
    %9 = arith.subf %3, %8 : vector<16x32xf32>
    %10 = arith.mulf %9, %9 : vector<16x32xf32>
    %cst_3 = arith.constant dense<0.000000e+00> : vector<16xf32>
    %11 = vector.multi_reduction <add>, %10, %cst_3 [1] : vector<16x32xf32> to vector<16xf32>
    %12 = vector.shape_cast %11 : vector<16xf32> to vector<16x1xf32>
    %cst_4 = arith.constant 3.200000e+01 : f32
    %13 = vector.broadcast %cst_4 : f32 to vector<16x1xf32>
    %14 = arith.divf %12, %13 : vector<16x1xf32>
    %15 = vector.broadcast %7 : vector<16x1xf32> to vector<16x32xf32>
    %16 = arith.subf %3, %15 : vector<16x32xf32>
    %cst_5 = arith.constant 9.99999974E-6 : f32
    %17 = vector.broadcast %cst_5 : f32 to vector<16x1xf32>
    %18 = arith.addf %14, %17 : vector<16x1xf32>
    %19 = math.rsqrt %18 : vector<16x1xf32>
    %20 = vector.broadcast %19 : vector<16x1xf32> to vector<16x32xf32>
    %21 = arith.mulf %16, %20 : vector<16x32xf32>
    %c0_6 = arith.constant 0 : index
    %c0_7 = arith.constant 0 : index
    %22 = vector.load %arg6[%c0_6, %c0_7] : memref<1x32xf32, #tpu.memory_space<vmem>>, vector<1x32xf32>
    %23 = vector.broadcast %22 : vector<1x32xf32> to vector<16x32xf32>
    %24 = arith.mulf %21, %23 : vector<16x32xf32>
    %c0_8 = arith.constant 0 : index
    %c0_9 = arith.constant 0 : index
    %25 = vector.load %arg7[%c0_8, %c0_9] : memref<1x32xf32, #tpu.memory_space<vmem>>, vector<1x32xf32>
    %26 = vector.broadcast %25 : vector<1x32xf32> to vector<16x32xf32>
    %27 = arith.addf %24, %26 : vector<16x32xf32>
    %28 = arith.truncf %27 : vector<16x32xf32> to vector<16x32xbf16>
    %c0_10 = arith.constant 0 : index
    %c0_11 = arith.constant 0 : index
    %29 = vector.load %arg9[%c0_10, %c0_11] : memref<16x128xf32, #tpu.memory_space<vmem>>, vector<16x128xf32>
    %c0_12 = arith.constant 0 : index
    %c0_13 = arith.constant 0 : index
    %30 = vector.load %arg4[%c0_12, %c0_13] : memref<32x128xbf16, #tpu.memory_space<vmem>>, vector<32x128xbf16>
    %cst_14 = arith.constant dense<0.000000e+00> : vector<16x128xf32>
    %31 = tpu.matmul %28, %30, %cst_14 {dimension_numbers = #tpu.dot_dimension_numbers<[1], [0], [0], [1], [0, 0, 1, 1], [], []>} : vector<16x32xbf16>, vector<32x128xbf16>, vector<16x128xf32> -> vector<16x128xf32>
    %32 = arith.addf %29, %31 : vector<16x128xf32>
    %c0_15 = arith.constant 0 : index
    %c0_16 = arith.constant 0 : index
    %33 = vector.load %arg9[%c0_15, %c0_16] : memref<16x128xf32, #tpu.memory_space<vmem>>, vector<16x128xf32>
    tpu.vector_store %arg9[%c0_15, %c0_16], %32 {strides = array<i32>} : memref<16x128xf32, #tpu.memory_space<vmem>>, vector<16x128xf32>,
    %c0_i32_17 = arith.constant 0 : i32
    %34 = arith.cmpi eq, %arg2, %c0_i32_17 : i32
    %35 = arith.extui %34 : i1 to i32
    %c0_i32_18 = arith.constant 0 : i32
    %36 = arith.cmpi ne, %35, %c0_i32_18 : i32
    scf.if %36 {
      %c0_19 = arith.constant 0 : index
      %c0_20 = arith.constant 0 : index
      %37 = vector.load %arg9[%c0_19, %c0_20] : memref<16x128xf32, #tpu.memory_space<vmem>>, vector<16x128xf32>
      %c0_21 = arith.constant 0 : index
      %c0_22 = arith.constant 0 : index
      %38 = vector.load %arg5[%c0_21, %c0_22] : memref<1x128xf32, #tpu.memory_space<vmem>>, vector<1x128xf32>
      %39 = vector.broadcast %38 : vector<1x128xf32> to vector<16x128xf32>
      %40 = arith.addf %37, %39 : vector<16x128xf32>
      %cst_23 = arith.constant 1.702000e+00 : f32
      %41 = vector.broadcast %cst_23 : f32 to vector<16x128xf32>
      %42 = arith.mulf %41, %40 : vector<16x128xf32>
      %43 = arith.negf %42 : vector<16x128xf32>
      %44 = math.exp %43 : vector<16x128xf32>
      %cst_24 = arith.constant 1.000000e+00 : f32
      %45 = vector.broadcast %cst_24 : f32 to vector<16x128xf32>
      %46 = arith.addf %45, %44 : vector<16x128xf32>
      %47 = arith.divf %45, %46 : vector<16x128xf32>
      %48 = arith.mulf %40, %47 : vector<16x128xf32>
      %c0_25 = arith.constant 0 : index
      %c0_26 = arith.constant 0 : index
      %49 = vector.load %arg8[%c0_25, %c0_26] : memref<16x128xf32, #tpu.memory_space<vmem>>, vector<16x128xf32>
      tpu.vector_store %arg8[%c0_25, %c0_26], %48 {strides = array<i32>} : memref<16x128xf32, #tpu.memory_space<vmem>>, vector<16x128xf32>,
    } else {
    }
    return
  }
  func.func @transform_0(%arg0: i32, %arg1: i32, %arg2: i32) -> (i32, i32) {
    %c0_i32 = arith.constant 0 : i32
    return %arg0, %arg2 : i32, i32
  }
  func.func @transform_1(%arg0: i32, %arg1: i32, %arg2: i32) -> (i32, i32) {
    %c0_i32 = arith.constant 0 : i32
    return %arg2, %arg1 : i32, i32
  }
  func.func @transform_2(%arg0: i32, %arg1: i32, %arg2: i32) -> (i32, i32) {
    %c0_i32 = arith.constant 0 : i32
    %c0_i32_0 = arith.constant 0 : i32
    return %c0_i32, %arg1 : i32, i32
  }
  func.func @transform_3(%arg0: i32, %arg1: i32, %arg2: i32) -> (i32, i32) {
    %c0_i32 = arith.constant 0 : i32
    %c0_i32_0 = arith.constant 0 : i32
    %c0_i32_1 = arith.constant 0 : i32
    return %c0_i32, %c0_i32_0 : i32, i32
  }
  func.func @transform_4(%arg0: i32, %arg1: i32, %arg2: i32) -> (i32, i32) {
    %c0_i32 = arith.constant 0 : i32
    %c0_i32_0 = arith.constant 0 : i32
    %c0_i32_1 = arith.constant 0 : i32
    return %c0_i32, %c0_i32_0 : i32, i32
  }
  func.func @transform_5(%arg0: i32, %arg1: i32, %arg2: i32) -> (i32, i32) {
    %c0_i32 = arith.constant 0 : i32
    return %arg0, %arg1 : i32, i32
  }
}

</mosaic_0001>

<llo_original>
// kernel: _lambda_.3
$region0: #{_lambda_.3}
  #allocation0 [shape = 'u32[]', space=smem, size = 0x4, offset = 0x4, fixed_abs, tag = 'smem constant byte address 0x4 - core index']
  #allocation1 [shape = 'u32[144,128]{1,0:T(1,128)}', space=vmem, size = 0x12000, scoped, tag = 'internal scratch']
  %s0 = inlined_call_operand.vmem [shape: f32[16,32], index: 0, kind: input, shape index: {}]
  %s1 = inlined_call_operand.vmem [shape: f32[1,32], index: 1, kind: input, shape index: {}]
  %s2 = inlined_call_operand.vmem [shape: f32[1,32], index: 2, kind: input, shape index: {}]
  %s3 = inlined_call_operand.vmem [shape: f32[16,32], index: 3, kind: output, shape index: {}]
  %s4 = sld [smem:[#allocation0]]
  $region22: #{_lambda_.3} parent=0
    _
  %s6 = ssub.s32 1, %s4
  %s7 = scalar_select 0, %s6, %s4
  // Predicated region
  $region2: #{_lambda_.3} parent=0 // pred_check
    _
  $region3: #{_lambda_.3} parent=0 // pred_check_branch
    %9 = sbr.rel (0) target = $region5
  $region4: #{_lambda_.3} parent=0 // pred_region
    _
  $region5: #{_lambda_.3} parent=0 // pred_fallthru
    _
  // Predicated region
  $region6: #{_lambda_.3} parent=0 // pred_check
    _
  $region7: #{_lambda_.3} parent=0 // pred_check_branch
    %11 = sbr.rel (0) target = $region9
  $region8: #{_lambda_.3} parent=0 // pred_region
    _
  $region9: #{_lambda_.3} parent=0 // pred_fallthru
    _
  // Predicated region
  $region10: #{_lambda_.3} parent=0 // pred_check
    _
  $region11: #{_lambda_.3} parent=0 // pred_check_branch
    %13 = sbr.rel (0) target = $region13
  $region12: #{_lambda_.3} parent=0 // pred_region
    _
  $region13: #{_lambda_.3} parent=0 // pred_fallthru
    _
  %v14 = vld [vmem:[%s0] sm:$0xff]
  %v15 = vld [vmem:[%s0 + $0x8] sm:$0xff]
  %vm16 = vcmask 261120
  %v17 = vsel %vm16, %v14, 0.0
  %18 = vadd.xlane.f32.xlu0 %v17
  %v19 = vpop.xlane.xlu0 %18
  %v20 = vsel %vm16, %v15, 0.0
  %21 = vadd.xlane.f32.xlu0 %v20
  %v22 = vpop.xlane.xlu0 %21
  %v23 = vrcp.pop 32.0
  %v24 = vmul.f32 %v19, %v23
  %v25 = vmul.f32 %v22, %v23
  %v26 = vsub.f32 %v14, %v24
  %v27 = vsub.f32 %v15, %v25
  %v28 = vmul.f32 %v26, %v26
  %v29 = vmul.f32 %v27, %v27
  %v30 = vsel %vm16, %v28, 0.0
  %31 = vadd.xlane.f32.xlu0 %v30
  %v32 = vpop.xlane.xlu0 %31
  %v33 = vsel %vm16, %v29, 0.0
  %34 = vadd.xlane.f32.xlu0 %v33
  %v35 = vpop.xlane.xlu0 %34
  %v36 = vmul.f32 %v32, %v23
  %v37 = vmul.f32 %v35, %v23
  %v38 = vadd.f32 %v36, 1e-05
  %v39 = vadd.f32 %v37, 1e-05
  %v40 = vrsqrt.pop %v38
  %v41 = vrsqrt.pop %v39
  %v42 = vmul.f32 %v26, %v40
  %v43 = vmul.f32 %v27, %v41
  %v44 = vld [vmem:[%s1] sm:$0x1]
  %v46 = vlaneseq
  %v47 = vshrl.u32 %v46, 7
  %v48 = vsub.s32 0, %v47
  %v49 = vrot.slane %v44, %v48
  %v51 = vmul.f32 %v42, %v49
  %v52 = vmul.f32 %v43, %v49
  %v53 = vld [vmem:[%s2] sm:$0x1]
  %v55 = vlaneseq
  %v56 = vshrl.u32 %v55, 7
  %v57 = vsub.s32 0, %v56
  %v58 = vrot.slane %v53, %v57
  %v60 = vadd.f32 %v51, %v58
  %v61 = vadd.f32 %v52, %v58
  %62 = vst.msk [vmem:[%s3] sm:$0xff] %vm16, %v60
  %63 = vst.msk [vmem:[%s3 + $0x8] sm:$0xff] %vm16, %v61
  // Predicated region
  $region14: #{_lambda_.3} parent=0 // pred_check
    _
  $region15: #{_lambda_.3} parent=0 // pred_check_branch
    %65 = sbr.rel (0) target = $region17
  $region16: #{_lambda_.3} parent=0 // pred_region
    _
  $region17: #{_lambda_.3} parent=0 // pred_fallthru
    _
  // Predicated region
  $region18: #{_lambda_.3} parent=0 // pred_check
    _
  $region19: #{_lambda_.3} parent=0 // pred_check_branch
    %67 = sbr.rel (0) target = $region21
  $region20: #{_lambda_.3} parent=0 // pred_region
    _
  $region21: #{_lambda_.3} parent=0 // pred_fallthru
    _

// kernel: closed_call.31
$region0: #{closed_call.31}
  #allocation0 [shape = 'u32[]', space=smem, size = 0x4, offset = 0x4, fixed_abs, tag = 'smem constant byte address 0x4 - core index']
  #allocation1 [shape = 'u32[144,128]{1,0:T(1,128)}', space=vmem, size = 0x12000, scoped, tag = 'internal scratch']
  #allocation2 [shape = 'f32[16,128]{1,0:T(8,128)}', space=vmem, size = 0x2000, scoped, tag = 'scratch operand']
  %s0 = inlined_call_operand.vmem [shape: f32[16,32], index: 0, kind: input, shape index: {}]
  %s1 = inlined_call_operand.vmem [shape: bf16[32,128], index: 1, kind: input, shape index: {}]
  %s2 = inlined_call_operand.vmem [shape: f32[1,128], index: 2, kind: input, shape index: {}]
  %s3 = inlined_call_operand.vmem [shape: f32[1,32], index: 3, kind: input, shape index: {}]
  %s4 = inlined_call_operand.vmem [shape: f32[1,32], index: 4, kind: input, shape index: {}]
  %s5 = inlined_call_operand.vmem [shape: f32[16,128], index: 5, kind: output, shape index: {}]
  %s6 = sld [smem:[#allocation0]]
  $region38: #{closed_call.31} parent=0
    _
  %s8 = ssub.s32 1, %s6
  %s9 = scalar_select 0, %s8, %s6
  // Predicated region
  $region2: #{closed_call.31} parent=0 // pred_check
    _
  $region3: #{closed_call.31} parent=0 // pred_check_branch
    %11 = sbr.rel (0) target = $region5
  $region4: #{closed_call.31} parent=0 // pred_region
    _
  $region5: #{closed_call.31} parent=0 // pred_fallthru
    _
  // Predicated region
  $region6: #{closed_call.31} parent=0 // pred_check
    _
  $region7: #{closed_call.31} parent=0 // pred_check_branch
    %13 = sbr.rel (0) target = $region9
  $region8: #{closed_call.31} parent=0 // pred_region
    _
  $region9: #{closed_call.31} parent=0 // pred_fallthru
    _
  // Predicated region
  $region10: #{closed_call.31} parent=0 // pred_check
    _
  $region11: #{closed_call.31} parent=0 // pred_check_branch
    %15 = sbr.rel (0) target = $region13
  $region12: #{closed_call.31} parent=0 // pred_region
    _
  $region13: #{closed_call.31} parent=0 // pred_fallthru
    _
  // Predicated region
  $region14: #{closed_call.31} parent=0 // pred_check
    _
  $region15: #{closed_call.31} parent=0 // pred_check_branch
    %17 = sbr.rel (0) target = $region17
  $region16: #{closed_call.31} parent=0 // pred_region
    _
  $region17: #{closed_call.31} parent=0 // pred_fallthru
    _
  // Predicated region
  $region18: #{closed_call.31} parent=0 // pred_check
    _
  $region19: #{closed_call.31} parent=0 // pred_check_branch
    %19 = sbr.rel (0) target = $region21
  $region20: #{closed_call.31} parent=0 // pred_region
    _
  $region21: #{closed_call.31} parent=0 // pred_fallthru
    _
  %p21 = scmp.eq.s32.totalorder 0, 0
  // Predicated region
  $region22: #{closed_call.31} parent=0 // pred_check
    %p22 = pneg %p21
  $region23: #{closed_call.31} parent=0 // pred_check_branch
    %24 = sbr.rel (%p22) target = $region25
  $region24: #{closed_call.31} parent=0 // pred_region
    %25 = vst [vmem:[#allocation2] sm:$0xff] 0.0
    %26 = vst [vmem:[#allocation2 + $0x8] sm:$0xff] 0.0
  $region25: #{closed_call.31} parent=0 // pred_fallthru
    _
  %v27 = vld [vmem:[%s0] sm:$0xff]
  %v28 = vld [vmem:[%s0 + $0x8] sm:$0xff]
  %vm29 = vcmask 261120
  %v30 = vsel %vm29, %v27, 0.0
  %31 = vadd.xlane.f32.xlu0 %v30
  %v32 = vpop.xlane.xlu0 %31
  %v33 = vsel %vm29, %v28, 0.0
  %34 = vadd.xlane.f32.xlu0 %v33
  %v35 = vpop.xlane.xlu0 %34
  %v36 = vrcp.pop 32.0
  %v37 = vmul.f32 %v32, %v36
  %v38 = vmul.f32 %v35, %v36
  %v39 = vsub.f32 %v27, %v37
  %v40 = vsub.f32 %v28, %v38
  %v41 = vmul.f32 %v39, %v39
  %v42 = vmul.f32 %v40, %v40
  %v43 = vsel %vm29, %v41, 0.0
  %44 = vadd.xlane.f32.xlu0 %v43
  %v45 = vpop.xlane.xlu0 %44
  %v46 = vsel %vm29, %v42, 0.0
  %47 = vadd.xlane.f32.xlu0 %v46
  %v48 = vpop.xlane.xlu0 %47
  %v49 = vmul.f32 %v45, %v36
  %v50 = vmul.f32 %v48, %v36
  %v51 = vadd.f32 %v49, 1e-05
  %v52 = vadd.f32 %v50, 1e-05
  %v53 = vrsqrt.pop %v51
  %v54 = vrsqrt.pop %v52
  %v55 = vmul.f32 %v39, %v53
  %v56 = vmul.f32 %v40, %v54
  %v57 = vld [vmem:[%s3] sm:$0x1]
  %v59 = vlaneseq
  %v60 = vshrl.u32 %v59, 7
  %v61 = vsub.s32 0, %v60
  %v62 = vrot.slane %v57, %v61
  %v64 = vmul.f32 %v55, %v62
  %v65 = vmul.f32 %v56, %v62
  %v66 = vld [vmem:[%s4] sm:$0x1]
  %v68 = vlaneseq
  %v69 = vshrl.u32 %v68, 7
  %v70 = vsub.s32 0, %v69
  %v71 = vrot.slane %v66, %v70
  %v73 = vadd.f32 %v64, %v71
  %v74 = vadd.f32 %v65, %v71
  %v75 = vpack.c.bf16 %v74, %v73
  %v76 = vld [vmem:[#allocation2] sm:$0xff]
  %v77 = vld [vmem:[#allocation2 + $0x8] sm:$0xff]
  %v78 = vld [vmem:[%s1] sm:$0xf]
  %v79 = vld [vmem:[%s1 + $0x4] sm:$0xf]
  %v80 = vld [vmem:[%s1 + $0x8] sm:$0xf]
  %v81 = vld [vmem:[%s1 + $0xc] sm:$0xf]
  %v86 = vunpack.c.l.b16 %v78
  %v87 = vunpack.c.l.b16 %v79
  %v88 = vunpack.c.l.b16 %v80
  %v89 = vunpack.c.l.b16 %v81
  %v90 = vpack.c.b16 %v87, %v86
  %v91 = vpack.c.b16 %v89, %v88
  %v95 = vsel %vm29, %v75, 0
  %97 = vmatprep.subr.bf16.mxu0 0
  %98 = vmatpush1.bf16.msra.mxu0 %v90
  %99 = vmatprep.subr.bf16.mxu0 0
  %100 = vmatpush1.bf16.msra.mxu0 %v91
  %101 = vmatprep.subr.bf16.mxu0 0
  %102 = vmatpush1.bf16.msra.mxu0 0
  %103 = vmatprep.subr.bf16.mxu0 0
  %104 = vmatpush1.bf16.msra.mxu0 0
  %105 = vmatprep.subr.bf16.mxu0 0
  %106 = vmatpush1.bf16.msra.mxu0 0
  %107 = vmatprep.subr.bf16.mxu0 0
  %108 = vmatpush1.bf16.msra.mxu0 0
  %109 = vmatprep.subr.bf16.mxu0 0
  %110 = vmatpush1.bf16.msra.mxu0 0
  %111 = vmatprep.subr.bf16.mxu0 0
  %112 = vmatpush1.bf16.msra.mxu0 0
  %113 = vmatprep.subr.bf16.mxu0 0
  %114 = vmatpush1.bf16.msra.mxu0 0
  %115 = vmatprep.subr.bf16.mxu0 0
  %116 = vmatpush1.bf16.msra.mxu0 0
  %117 = vmatprep.subr.bf16.mxu0 0
  %118 = vmatpush1.bf16.msra.mxu0 0
  %119 = vmatprep.subr.bf16.mxu0 0
  %120 = vmatpush1.bf16.msra.mxu0 0
  %121 = vmatprep.subr.bf16.mxu0 0
  %122 = vmatpush1.bf16.msra.mxu0 0
  %123 = vmatprep.subr.bf16.mxu0 0
  %124 = vmatpush1.bf16.msra.mxu0 0
  %125 = vmatprep.subr.bf16.mxu0 0
  %126 = vmatpush1.bf16.msra.mxu0 0
  %127 = vmatprep.subr.bf16.mxu0 0
  %128 = vmatpush1.bf16.msra.mxu0 0
  %129 = vmatprep.mubr.bf16.mxu0 0
  %130 = vmatmul.mubr.bf16.gmra.mrb[0].mxu0 %v95
  %v131 = vpop.f32.mrb[0].mxu0
  %v132 = vadd.f32 0.0, %v131
  %v133 = vpop.f32.mrb[0].mxu0
  %v134 = vpop.f32.mrb[0].mxu0
  %v135 = vadd.f32 0.0, %v134
  %v136 = vpop.f32.mrb[0].mxu0
  %137 = vdwg.mxu0
  %v138 = vadd.f32 %v76, %v132
  %v139 = vadd.f32 %v77, %v135
  %140 = vst [vmem:[#allocation2] sm:$0xff] %v138
  %141 = vst [vmem:[#allocation2 + $0x8] sm:$0xff] %v139
  // Predicated region
  $region26: #{closed_call.31} parent=0 // pred_check
    %p142 = pneg %p21
  $region27: #{closed_call.31} parent=0 // pred_check_branch
    %144 = sbr.rel (%p142) target = $region29
  $region28: #{closed_call.31} parent=0 // pred_region
    %v145 = vld [vmem:[#allocation2] sm:$0xff]
    %v146 = vld [vmem:[#allocation2 + $0x8] sm:$0xff]
    %v147 = vld [vmem:[%s2] sm:$0x1]
    %v149 = vlaneseq
    %v150 = vshrl.u32 %v149, 7
    %v151 = vsub.s32 0, %v150
    %v152 = vrot.slane %v147, %v151
    %v154 = vadd.f32 %v145, %v152
    %v155 = vadd.f32 %v146, %v152
    %156 = vst [vmem:[%s5] sm:$0xff] %v154
    %157 = vst [vmem:[%s5 + $0x8] sm:$0xff] %v155
  $region29: #{closed_call.31} parent=0 // pred_fallthru
    _
  // Predicated region
  $region30: #{closed_call.31} parent=0 // pred_check
    _
  $region31: #{closed_call.31} parent=0 // pred_check_branch
    %159 = sbr.rel (0) target = $region33
  $region32: #{closed_call.31} parent=0 // pred_region
    _
  $region33: #{closed_call.31} parent=0 // pred_fallthru
    _
  // Predicated region
  $region34: #{closed_call.31} parent=0 // pred_check
    _
  $region35: #{closed_call.31} parent=0 // pred_check_branch
    %161 = sbr.rel (0) target = $region37
  $region36: #{closed_call.31} parent=0 // pred_region
    _
  $region37: #{closed_call.31} parent=0 // pred_fallthru
    _

// kernel: _lambda_.2
$region0: #{_lambda_.2}
  #allocation0 [shape = 'u32[]', space=smem, size = 0x4, offset = 0x4, fixed_abs, tag = 'smem constant byte address 0x4 - core index']
  #allocation1 [shape = 'u32[144,128]{1,0:T(1,128)}', space=vmem, size = 0x12000, scoped, tag = 'internal scratch']
  #allocation2 [shape = 'f32[8,128]{1,0:T(8,128)}', space=vmem, size = 0x1000, scoped, tag = 'scratch operand']
  %s0 = inlined_call_operand.vmem [shape: f32[8,256], index: 0, kind: input, shape index: {}]
  %s1 = inlined_call_operand.vmem [shape: bf16[256,128], index: 1, kind: input, shape index: {}]
  %s2 = inlined_call_operand.vmem [shape: f32[1,128], index: 2, kind: input, shape index: {}]
  %s3 = inlined_call_operand.vmem [shape: f32[8,128], index: 3, kind: output, shape index: {}]
  %s4 = sld [smem:[#allocation0]]
  $region30: #{_lambda_.2} parent=0
    _
  %s6 = ssub.s32 1, %s4
  %s7 = scalar_select 0, %s6, %s4
  // Predicated region
  $region2: #{_lambda_.2} parent=0 // pred_check
    _
  $region3: #{_lambda_.2} parent=0 // pred_check_branch
    %9 = sbr.rel (0) target = $region5
  $region4: #{_lambda_.2} parent=0 // pred_region
    _
  $region5: #{_lambda_.2} parent=0 // pred_fallthru
    _
  // Predicated region
  $region6: #{_lambda_.2} parent=0 // pred_check
    _
  $region7: #{_lambda_.2} parent=0 // pred_check_branch
    %11 = sbr.rel (0) target = $region9
  $region8: #{_lambda_.2} parent=0 // pred_region
    _
  $region9: #{_lambda_.2} parent=0 // pred_fallthru
    _
  // Predicated region
  $region10: #{_lambda_.2} parent=0 // pred_check
    _
  $region11: #{_lambda_.2} parent=0 // pred_check_branch
    %13 = sbr.rel (0) target = $region13
  $region12: #{_lambda_.2} parent=0 // pred_region
    _
  $region13: #{_lambda_.2} parent=0 // pred_fallthru
    _
  %p15 = scmp.eq.s32.totalorder 0, 0
  // Predicated region
  $region14: #{_lambda_.2} parent=0 // pred_check
    %p16 = pneg %p15
  $region15: #{_lambda_.2} parent=0 // pred_check_branch
    %18 = sbr.rel (%p16) target = $region17
  $region16: #{_lambda_.2} parent=0 // pred_region
    %19 = vst [vmem:[#allocation2] sm:$0xff] 0.0
  $region17: #{_lambda_.2} parent=0 // pred_fallthru
    _
  %v20 = vld [vmem:[%s0] sm:$0xff]
  %v21 = vld [vmem:[%s0 + $0x8] sm:$0xff]
  %v22 = vpack.c.bf16 %v20, %v20
  %v23 = vpack.c.bf16 %v21, %v21
  %v24 = vld [vmem:[#allocation2] sm:$0xff]
  %v25 = vld [vmem:[%s1] sm:$0xf]
  %v26 = vld [vmem:[%s1 + $0x4] sm:$0xf]
  %v27 = vld [vmem:[%s1 + $0x8] sm:$0xf]
  %v28 = vld [vmem:[%s1 + $0xc] sm:$0xf]
  %v29 = vld [vmem:[%s1 + $0x10] sm:$0xf]
  %v30 = vld [vmem:[%s1 + $0x14] sm:$0xf]
  %v31 = vld [vmem:[%s1 + $0x18] sm:$0xf]
  %v32 = vld [vmem:[%s1 + $0x1c] sm:$0xf]
  %v33 = vld [vmem:[%s1 + $0x20] sm:$0xf]
  %v34 = vld [vmem:[%s1 + $0x24] sm:$0xf]
  %v35 = vld [vmem:[%s1 + $0x28] sm:$0xf]
  %v36 = vld [vmem:[%s1 + $0x2c] sm:$0xf]
  %v37 = vld [vmem:[%s1 + $0x30] sm:$0xf]
  %v38 = vld [vmem:[%s1 + $0x34] sm:$0xf]
  %v39 = vld [vmem:[%s1 + $0x38] sm:$0xf]
  %v40 = vld [vmem:[%s1 + $0x3c] sm:$0xf]
  %v41 = vld [vmem:[%s1 + $0x40] sm:$0xf]
  %v42 = vld [vmem:[%s1 + $0x44] sm:$0xf]
  %v43 = vld [vmem:[%s1 + $0x48] sm:$0xf]
  %v44 = vld [vmem:[%s1 + $0x4c] sm:$0xf]
  %v45 = vld [vmem:[%s1 + $0x50] sm:$0xf]
  %v46 = vld [vmem:[%s1 + $0x54] sm:$0xf]
  %v47 = vld [vmem:[%s1 + $0x58] sm:$0xf]
  %v48 = vld [vmem:[%s1 + $0x5c] sm:$0xf]
  %v49 = vld [vmem:[%s1 + $0x60] sm:$0xf]
  %v50 = vld [vmem:[%s1 + $0x64] sm:$0xf]
  %v51 = vld [vmem:[%s1 + $0x68] sm:$0xf]
  %v52 = vld [vmem:[%s1 + $0x6c] sm:$0xf]
  %v53 = vld [vmem:[%s1 + $0x70] sm:$0xf]
  %v54 = vld [vmem:[%s1 + $0x74] sm:$0xf]
  %v55 = vld [vmem:[%s1 + $0x78] sm:$0xf]
  %v56 = vld [vmem:[%s1 + $0x7c] sm:$0xf]
  %v89 = vunpack.c.l.b16 %v25
  %v90 = vunpack.c.l.b16 %v26
  %v91 = vunpack.c.l.b16 %v27
  %v92 = vunpack.c.l.b16 %v28
  %v93 = vunpack.c.l.b16 %v29
  %v94 = vunpack.c.l.b16 %v30
  %v95 = vunpack.c.l.b16 %v31
  %v96 = vunpack.c.l.b16 %v32
  %v97 = vunpack.c.l.b16 %v33
  %v98 = vunpack.c.l.b16 %v34
  %v99 = vunpack.c.l.b16 %v35
  %v100 = vunpack.c.l.b16 %v36
  %v101 = vunpack.c.l.b16 %v37
  %v102 = vunpack.c.l.b16 %v38
  %v103 = vunpack.c.l.b16 %v39
  %v104 = vunpack.c.l.b16 %v40
  %v105 = vunpack.c.l.b16 %v41
  %v106 = vunpack.c.l.b16 %v42
  %v107 = vunpack.c.l.b16 %v43
  %v108 = vunpack.c.l.b16 %v44
  %v109 = vunpack.c.l.b16 %v45
  %v110 = vunpack.c.l.b16 %v46
  %v111 = vunpack.c.l.b16 %v47
  %v112 = vunpack.c.l.b16 %v48
  %v113 = vunpack.c.l.b16 %v49
  %v114 = vunpack.c.l.b16 %v50
  %v115 = vunpack.c.l.b16 %v51
  %v116 = vunpack.c.l.b16 %v52
  %v117 = vunpack.c.l.b16 %v53
  %v118 = vunpack.c.l.b16 %v54
  %v119 = vunpack.c.l.b16 %v55
  %v120 = vunpack.c.l.b16 %v56
  %v121 = vpack.c.b16 %v90, %v89
  %v122 = vpack.c.b16 %v92, %v91
  %v123 = vpack.c.b16 %v94, %v93
  %v124 = vpack.c.b16 %v96, %v95
  %v125 = vpack.c.b16 %v98, %v97
  %v126 = vpack.c.b16 %v100, %v99
  %v127 = vpack.c.b16 %v102, %v101
  %v128 = vpack.c.b16 %v104, %v103
  %v129 = vpack.c.b16 %v106, %v105
  %v130 = vpack.c.b16 %v108, %v107
  %v131 = vpack.c.b16 %v110, %v109
  %v132 = vpack.c.b16 %v112, %v111
  %v133 = vpack.c.b16 %v114, %v113
  %v134 = vpack.c.b16 %v116, %v115
  %v135 = vpack.c.b16 %v118, %v117
  %v136 = vpack.c.b16 %v120, %v119
  %153 = vmatprep.subr.bf16.mxu0 0
  %154 = vmatpush1.bf16.msra.mxu0 %v121
  %155 = vmatprep.subr.bf16.mxu0 0
  %156 = vmatpush1.bf16.msra.mxu0 %v122
  %157 = vmatprep.subr.bf16.mxu0 0
  %158 = vmatpush1.bf16.msra.mxu0 %v123
  %159 = vmatprep.subr.bf16.mxu0 0
  %160 = vmatpush1.bf16.msra.mxu0 %v124
  %161 = vmatprep.subr.bf16.mxu0 0
  %162 = vmatpush1.bf16.msra.mxu0 %v125
  %163 = vmatprep.subr.bf16.mxu0 0
  %164 = vmatpush1.bf16.msra.mxu0 %v126
  %165 = vmatprep.subr.bf16.mxu0 0
  %166 = vmatpush1.bf16.msra.mxu0 %v127
  %167 = vmatprep.subr.bf16.mxu0 0
  %168 = vmatpush1.bf16.msra.mxu0 %v128
  %169 = vmatprep.subr.bf16.mxu0 0
  %170 = vmatpush1.bf16.msra.mxu0 %v129
  %171 = vmatprep.subr.bf16.mxu0 0
  %172 = vmatpush1.bf16.msra.mxu0 %v130
  %173 = vmatprep.subr.bf16.mxu0 0
  %174 = vmatpush1.bf16.msra.mxu0 %v131
  %175 = vmatprep.subr.bf16.mxu0 0
  %176 = vmatpush1.bf16.msra.mxu0 %v132
  %177 = vmatprep.subr.bf16.mxu0 0
  %178 = vmatpush1.bf16.msra.mxu0 %v133
  %179 = vmatprep.subr.bf16.mxu0 0
  %180 = vmatpush1.bf16.msra.mxu0 %v134
  %181 = vmatprep.subr.bf16.mxu0 0
  %182 = vmatpush1.bf16.msra.mxu0 %v135
  %183 = vmatprep.subr.bf16.mxu0 0
  %184 = vmatpush1.bf16.msra.mxu0 %v136
  %185 = vmatprep.mubr.bf16.mxu0 %v23
  %186 = vmatmul.mubr.bf16.gmra.mrb[0].mxu0 %v22
  %v187 = vpop.f32.mrb[0].mxu0
  %v188 = vadd.f32 0.0, %v187
  %v189 = vpop.f32.mrb[0].mxu0
  %v190 = vpop.f32.mrb[0].mxu0
  %v191 = vpop.f32.mrb[0].mxu0
  %192 = vdwg.mxu0
  %v193 = vadd.f32 %v24, %v188
  %194 = vst [vmem:[#allocation2] sm:$0xff] %v193
  // Predicated region
  $region18: #{_lambda_.2} parent=0 // pred_check
    %p195 = pneg %p15
  $region19: #{_lambda_.2} parent=0 // pred_check_branch
    %197 = sbr.rel (%p195) target = $region21
  $region20: #{_lambda_.2} parent=0 // pred_region
    %v198 = vld [vmem:[#allocation2] sm:$0xff]
    %v199 = vld [vmem:[%s2] sm:$0x1]
    %v201 = vlaneseq
    %v202 = vshrl.u32 %v201, 7
    %v203 = vsub.s32 0, %v202
    %v204 = vrot.slane %v199, %v203
    %v206 = vadd.f32 %v198, %v204
    %207 = vst [vmem:[%s3] sm:$0xff] %v206
  $region21: #{_lambda_.2} parent=0 // pred_fallthru
    _
  // Predicated region
  $region22: #{_lambda_.2} parent=0 // pred_check
    _
  $region23: #{_lambda_.2} parent=0 // pred_check_branch
    %209 = sbr.rel (0) target = $region25
  $region24: #{_lambda_.2} parent=0 // pred_region
    _
  $region25: #{_lambda_.2} parent=0 // pred_fallthru
    _
  // Predicated region
  $region26: #{_lambda_.2} parent=0 // pred_check
    _
  $region27: #{_lambda_.2} parent=0 // pred_check_branch
    %211 = sbr.rel (0) target = $region29
  $region28: #{_lambda_.2} parent=0 // pred_region
    _
  $region29: #{_lambda_.2} parent=0 // pred_fallthru
    _

// kernel: closed_call.32
$region0: #{closed_call.32}
  #allocation0 [shape = 'u32[]', space=smem, size = 0x4, offset = 0x4, fixed_abs, tag = 'smem constant byte address 0x4 - core index']
  #allocation1 [shape = 'u32[144,128]{1,0:T(1,128)}', space=vmem, size = 0x12000, scoped, tag = 'internal scratch']
  #allocation2 [shape = 'f32[8,1]{1,0:T(8,128)}', space=vmem, size = 0x1000, scoped, tag = 'scratch operand']
  #allocation3 [shape = 'f32[8,1]{1,0:T(8,128)}', space=vmem, size = 0x1000, scoped, tag = 'scratch operand']
  #allocation4 [shape = 'f32[8,128]{1,0:T(8,128)}', space=vmem, size = 0x1000, scoped, tag = 'scratch operand']
  %s0 = inlined_call_operand.vmem [shape: f32[8,8,128], index: 0, kind: input, shape index: {}]
  %s1 = inlined_call_operand.vmem [shape: f32[8,8,128], index: 1, kind: input, shape index: {}]
  %s2 = inlined_call_operand.vmem [shape: f32[8,8,128], index: 2, kind: input, shape index: {}]
  %s3 = inlined_call_operand.vmem [shape: f32[8,8,128], index: 3, kind: output, shape index: {}]
  %s4 = sld [smem:[#allocation0]]
  $region53: #{closed_call.32} parent=0
    _
  %s6 = ssub.s32 1, %s4
  %s7 = scalar_select 0, %s6, %s4
  loop: start=0, step=1, limit=10
  $region2: #{closed_call.32} parent=0 // loop_pre_header
    _
  $region3: #{closed_call.32} parent=0 // loop_header
    %s9 = sphi 0, %s13
    %p10 = scmp.ge.s32.totalorder %s9, 10
    %s16 = sphi 0, %s35
    %s17 = sphi 0, %s31
    %s18 = sphi 0, %s27
    %s19 = sphi 0, %s16
    %s20 = sphi 0, %s17
    %s21 = sphi 0, %s18
    %s22 = sphi 0, %s19
    %s23 = sphi 0, %s20
    %s24 = sphi 0, %s21
    %s40 = sphi 0, %s42
    %s43 = sphi 0, %s40
    %s44 = sphi 0, %s43
    %s60 = sphi 0, %s44
    %s68 = sphi 0, %s70
    %s71 = sphi 0, %s68
    %s72 = sphi 0, %s71
    %s88 = sphi 0, %s72
    %s96 = sphi 0, %s98
    %s99 = sphi 0, %s96
    %s100 = sphi 0, %s99
    %s116 = sphi 0, %s100
    %s124 = sphi 0, %s126
    %s127 = sphi 0, %s124
    %s128 = sphi 0, %s127
    %s144 = sphi 0, %s128
  $region4: #{closed_call.32} parent=0 // loop_header_branch
    %12 = sbr.rel (%p10) target = $region8
  $region5: #{closed_call.32} parent=0 // loop_body
    %s14 = ssub.s32 %s9, 1
    %s15 = ssub.s32 %s9, 2
    %s25 = sadd.s32 1, %s18
    %p26 = scmp.ge.s32.totalorder %s25, 1
    %s27 = scalar_select %p26, 0, %s25
    %s28 = sadd.s32 1, %s17
    %s29 = scalar_select %p26, %s28, %s17
    %p30 = scmp.ge.s32.totalorder %s29, 1
    %s31 = scalar_select %p30, 0, %s29
    %s32 = sadd.s32 1, %s16
    %s33 = scalar_select %p30, %s32, %s16
    %p34 = scmp.ge.s32.totalorder %s33, 8
    %s35 = scalar_select %p34, 0, %s33
    %s36 = ssub.s32 %s16, %s35
    %s37 = ssub.s32 %s17, %s31
    %s38 = sor.u32 %s36, %s37
    %p39 = scmp.eq.s32.totalorder %s38, 0
    %s41 = sadd.s32 %s40, 1
    %s42 = scalar_select %p39, %s40, %s41
    %p45 = pneg %p39
    %p46 = scmp.eq.s32.totalorder %s9, 7
    %p47 = por %p45, %p46
    %p48 = scmp.ne.s32.totalorder %s40, %s43
    %p49 = scmp.eq.s32.totalorder %s9, 0
    %p50 = por %p48, %p49
    %p51 = scmp.ne.s32.totalorder %s40, %s43
    %p52 = scmp.eq.s32.totalorder %s14, 7
    %p53 = por %p51, %p52
    %p54 = scmp.ne.s32.totalorder %s43, %s44
    %p55 = scmp.eq.s32.totalorder %s14, 0
    %p56 = por %p54, %p55
    %p57 = scmp.ne.s32.totalorder %s43, %s44
    %p58 = scmp.eq.s32.totalorder %s15, 7
    %p59 = por %p57, %p58
    %p61 = scmp.ne.s32.totalorder %s44, %s60
    %p62 = scmp.eq.s32.totalorder %s15, 0
    %p63 = por %p61, %p62
    %s64 = ssub.s32 %s16, %s35
    %s65 = ssub.s32 %s18, %s27
    %s66 = sor.u32 %s64, %s65
    %p67 = scmp.eq.s32.totalorder %s66, 0
    %s69 = sadd.s32 %s68, 1
    %s70 = scalar_select %p67, %s68, %s69
    %p73 = pneg %p67
    %p74 = scmp.eq.s32.totalorder %s9, 7
    %p75 = por %p73, %p74
    %p76 = scmp.ne.s32.totalorder %s68, %s71
    %p77 = scmp.eq.s32.totalorder %s9, 0
    %p78 = por %p76, %p77
    %p79 = scmp.ne.s32.totalorder %s68, %s71
    %p80 = scmp.eq.s32.totalorder %s14, 7
    %p81 = por %p79, %p80
    %p82 = scmp.ne.s32.totalorder %s71, %s72
    %p83 = scmp.eq.s32.totalorder %s14, 0
    %p84 = por %p82, %p83
    %p85 = scmp.ne.s32.totalorder %s71, %s72
    %p86 = scmp.eq.s32.totalorder %s15, 7
    %p87 = por %p85, %p86
    %p89 = scmp.ne.s32.totalorder %s72, %s88
    %p90 = scmp.eq.s32.totalorder %s15, 0
    %p91 = por %p89, %p90
    %s92 = ssub.s32 %s16, %s35
    %s93 = ssub.s32 %s18, %s27
    %s94 = sor.u32 %s92, %s93
    %p95 = scmp.eq.s32.totalorder %s94, 0
    %s97 = sadd.s32 %s96, 1
    %s98 = scalar_select %p95, %s96, %s97
    %p101 = pneg %p95
    %p102 = scmp.eq.s32.totalorder %s9, 7
    %p103 = por %p101, %p102
    %p104 = scmp.ne.s32.totalorder %s96, %s99
    %p105 = scmp.eq.s32.totalorder %s9, 0
    %p106 = por %p104, %p105
    %p107 = scmp.ne.s32.totalorder %s96, %s99
    %p108 = scmp.eq.s32.totalorder %s14, 7
    %p109 = por %p107, %p108
    %p110 = scmp.ne.s32.totalorder %s99, %s100
    %p111 = scmp.eq.s32.totalorder %s14, 0
    %p112 = por %p110, %p111
    %p113 = scmp.ne.s32.totalorder %s99, %s100
    %p114 = scmp.eq.s32.totalorder %s15, 7
    %p115 = por %p113, %p114
    %p117 = scmp.ne.s32.totalorder %s100, %s116
    %p118 = scmp.eq.s32.totalorder %s15, 0
    %p119 = por %p117, %p118
    %s120 = ssub.s32 %s16, %s35
    %s121 = ssub.s32 %s17, %s31
    %s122 = sor.u32 %s120, %s121
    %p123 = scmp.eq.s32.totalorder %s122, 0
    %s125 = sadd.s32 %s124, 1
    %s126 = scalar_select %p123, %s124, %s125
    %p129 = pneg %p123
    %p130 = scmp.eq.s32.totalorder %s9, 7
    %p131 = por %p129, %p130
    %p132 = scmp.ne.s32.totalorder %s124, %s127
    %p133 = scmp.eq.s32.totalorder %s9, 0
    %p134 = por %p132, %p133
    %p135 = scmp.ne.s32.totalorder %s124, %s127
    %p136 = scmp.eq.s32.totalorder %s14, 7
    %p137 = por %p135, %p136
    %p138 = scmp.ne.s32.totalorder %s127, %s128
    %p139 = scmp.eq.s32.totalorder %s14, 0
    %p140 = por %p138, %p139
    %p141 = scmp.ne.s32.totalorder %s127, %s128
    %p142 = scmp.eq.s32.totalorder %s15, 7
    %p143 = por %p141, %p142
    %p145 = scmp.ne.s32.totalorder %s128, %s144
    %p146 = scmp.eq.s32.totalorder %s15, 0
    %p147 = por %p145, %p146
    %p148 = scmp.le.s32.totalorder 1, %s9
    %p149 = scmp.lt.s32.totalorder %s9, 9
    %p150 = pnand %p148, %p149
    %p151 = pneg %p150
    // Predicated region
    $region9: #{closed_call.32} parent=5 // pred_check
      _
    $region10: #{closed_call.32} parent=5 // pred_check_branch
      %153 = sbr.rel (%p150) target = $region12
    $region11: #{closed_call.32} parent=5 // pred_region
      %s154 = ssub.s32 %s9, 1
    $region12: #{closed_call.32} parent=5 // pred_fallthru
      _
    %p155 = scmp.lt.s32.totalorder %s9, 8
    // Predicated region
    $region13: #{closed_call.32} parent=5 // pred_check
      %p156 = pneg %p155
    $region14: #{closed_call.32} parent=5 // pred_check_branch
      %158 = sbr.rel (%p156) target = $region16
    $region15: #{closed_call.32} parent=5 // pred_region
      // Predicated region
      $region17: #{closed_call.32} parent=15 // pred_check
        %p159 = pneg %p50
      $region18: #{closed_call.32} parent=15 // pred_check_branch
        %161 = sbr.rel (%p159) target = $region20
      $region19: #{closed_call.32} parent=15 // pred_region
        %p162 = scmp.lt.s32.totalorder %s16, 7
        %s163 = scalar_select %p162, %s16, 7
        %p164 = scmp.lt.s32.totalorder %s17, 0
        %s165 = scalar_select %p164, %s17, 0
        %s166 = sadd.s32 %s165, %s163
        %s167 = smul.addr %s166, 8
        %s168 = scalar_lea.vmem %s0, %s167
      $region20: #{closed_call.32} parent=15 // pred_fallthru
        _
      // Predicated region
      $region21: #{closed_call.32} parent=15 // pred_check
        %p169 = pneg %p78
      $region22: #{closed_call.32} parent=15 // pred_check_branch
        %171 = sbr.rel (%p169) target = $region24
      $region23: #{closed_call.32} parent=15 // pred_region
        %p172 = scmp.lt.s32.totalorder %s16, 7
        %s173 = scalar_select %p172, %s16, 7
        %p174 = scmp.lt.s32.totalorder %s18, 0
        %s175 = scalar_select %p174, %s18, 0
        %s176 = sadd.s32 %s175, %s173
        %s177 = smul.addr %s176, 8
        %s178 = scalar_lea.vmem %s1, %s177
      $region24: #{closed_call.32} parent=15 // pred_fallthru
        _
      // Predicated region
      $region25: #{closed_call.32} parent=15 // pred_check
        %p179 = pneg %p106
      $region26: #{closed_call.32} parent=15 // pred_check_branch
        %181 = sbr.rel (%p179) target = $region28
      $region27: #{closed_call.32} parent=15 // pred_region
        %p182 = scmp.lt.s32.totalorder %s16, 7
        %s183 = scalar_select %p182, %s16, 7
        %p184 = scmp.lt.s32.totalorder %s18, 0
        %s185 = scalar_select %p184, %s18, 0
        %s186 = sadd.s32 %s185, %s183
        %s187 = smul.addr %s186, 8
        %s188 = scalar_lea.vmem %s2, %s187
      $region28: #{closed_call.32} parent=15 // pred_fallthru
        _
    $region16: #{closed_call.32} parent=5 // pred_fallthru
      _
    %p189 = scmp.le.s32.totalorder 1, %s9
    %p190 = scmp.lt.s32.totalorder %s9, 9
    %p191 = pnand %p189, %p190
    %p192 = pneg %p191
    // Predicated region
    $region29: #{closed_call.32} parent=5 // pred_check
      _
    $region30: #{closed_call.32} parent=5 // pred_check_branch
      %194 = sbr.rel (%p191) target = $region32
    $region31: #{closed_call.32} parent=5 // pred_region
      %s195 = ssub.s32 %s9, 1
      %p196 = scmp.lt.s32.totalorder %s19, 7
      %s197 = scalar_select %p196, %s19, 7
      %p198 = scmp.lt.s32.totalorder %s20, 0
      %s199 = scalar_select %p198, %s20, 0
      %s200 = sadd.s32 %s199, %s197
      %s201 = smul.addr %s200, 8
      %s202 = scalar_lea.vmem %s0, %s201
      %p203 = pneg %p56
      %p204 = pneg %p53
      %p205 = scmp.lt.s32.totalorder %s19, 7
      %s206 = scalar_select %p205, %s19, 7
      %p207 = scmp.lt.s32.totalorder %s21, 0
      %s208 = scalar_select %p207, %s21, 0
      %s209 = sadd.s32 %s208, %s206
      %s210 = smul.addr %s209, 8
      %s211 = scalar_lea.vmem %s1, %s210
      %p212 = pneg %p84
      %p213 = pneg %p81
      %p214 = scmp.lt.s32.totalorder %s19, 7
      %s215 = scalar_select %p214, %s19, 7
      %p216 = scmp.lt.s32.totalorder %s21, 0
      %s217 = scalar_select %p216, %s21, 0
      %s218 = sadd.s32 %s217, %s215
      %s219 = smul.addr %s218, 8
      %s220 = scalar_lea.vmem %s2, %s219
      %p221 = pneg %p112
      %p222 = pneg %p109
      %p223 = pneg %p140
      %p224 = pneg %p137
      %p225 = scmp.lt.s32.totalorder %s19, 7
      %s226 = scalar_select %p225, %s19, 7
      %p227 = scmp.lt.s32.totalorder %s20, 0
      %s228 = scalar_select %p227, %s20, 0
      %s229 = sadd.s32 %s228, %s226
      %s230 = smul.addr %s229, 8
      %s231 = scalar_lea.vmem %s3, %s230
      %p232 = scmp.lt.s32.totalorder %s19, 7
      %s233 = scalar_select %p232, %s19, 7
      %p234 = scmp.lt.s32.totalorder %s20, 0
      %s235 = scalar_select %p234, %s20, 0
      %s236 = sadd.s32 %s235, %s233
      %s237 = smul.addr %s236, 8
      %s238 = scalar_lea.vmem %s0, %s237
      %p239 = scmp.lt.s32.totalorder %s19, 7
      %s240 = scalar_select %p239, %s19, 7
      %p241 = scmp.lt.s32.totalorder %s21, 0
      %s242 = scalar_select %p241, %s21, 0
      %s243 = sadd.s32 %s242, %s240
      %s244 = smul.addr %s243, 8
      %s245 = scalar_lea.vmem %s1, %s244
      %p246 = scmp.lt.s32.totalorder %s19, 7
      %s247 = scalar_select %p246, %s19, 7
      %p248 = scmp.lt.s32.totalorder %s21, 0
      %s249 = scalar_select %p248, %s21, 0
      %s250 = sadd.s32 %s249, %s247
      %s251 = smul.addr %s250, 8
      %s252 = scalar_lea.vmem %s2, %s251
      %p253 = scmp.lt.s32.totalorder %s19, 7
      %s254 = scalar_select %p253, %s19, 7
      %p255 = scmp.lt.s32.totalorder %s20, 0
      %s256 = scalar_select %p255, %s20, 0
      %s257 = sadd.s32 %s256, %s254
      %s258 = smul.addr %s257, 8
      %s259 = scalar_lea.vmem %s3, %s258
      %p261 = scmp.eq.s32.totalorder %s21, 0
      // Predicated region
      $region33: #{closed_call.32} parent=31 // pred_check
        %p262 = pneg %p261
      $region34: #{closed_call.32} parent=31 // pred_check_branch
        %264 = sbr.rel (%p262) target = $region36
      $region35: #{closed_call.32} parent=31 // pred_region
        %vm265 = vcmask 7168
        %266 = vst.msk [vmem:[#allocation2] sm:$0xff] %vm265, -1e+30
        %267 = vst.msk [vmem:[#allocation3] sm:$0xff] %vm265, 0.0
        %268 = vst [vmem:[#allocation4] sm:$0xff] 0.0
      $region36: #{closed_call.32} parent=31 // pred_fallthru
        _
      %v269 = vld [vmem:[%s238] sm:$0xff]
      %v270 = vmul.f32 %v269, 0.35355338
      %v271 = vpack.c.bf16 %v270, %v270
      %v272 = vld [vmem:[%s245] sm:$0xff]
      %v273 = vpack.c.bf16 %v272, %v272
      %274 = vmatprep.subr.bf16.mxu0 0
      %275 = vmatpush1.bf16.xpose.msra.mxu0 %v273
      %276 = vmatprep.subr.bf16.mxu0 0
      %277 = vmatpush1.bf16.xpose.msra.mxu0 0
      %278 = vmatprep.subr.bf16.mxu0 0
      %279 = vmatpush1.bf16.xpose.msra.mxu0 0
      %280 = vmatprep.subr.bf16.mxu0 0
      %281 = vmatpush1.bf16.xpose.msra.mxu0 0
      %282 = vmatprep.subr.bf16.mxu0 0
      %283 = vmatpush1.bf16.xpose.msra.mxu0 0
      %284 = vmatprep.subr.bf16.mxu0 0
      %285 = vmatpush1.bf16.xpose.msra.mxu0 0
      %286 = vmatprep.subr.bf16.mxu0 0
      %287 = vmatpush1.bf16.xpose.msra.mxu0 0
      %288 = vmatprep.subr.bf16.mxu0 0
      %289 = vmatpush1.bf16.xpose.msra.mxu0 0
      %290 = vmatprep.subr.bf16.mxu0 0
      %291 = vmatpush1.bf16.xpose.msra.mxu0 0
      %292 = vmatprep.subr.bf16.mxu0 0
      %293 = vmatpush1.bf16.xpose.msra.mxu0 0
      %294 = vmatprep.subr.bf16.mxu0 0
      %295 = vmatpush1.bf16.xpose.msra.mxu0 0
      %296 = vmatprep.subr.bf16.mxu0 0
      %297 = vmatpush1.bf16.xpose.msra.mxu0 0
      %298 = vmatprep.subr.bf16.mxu0 0
      %299 = vmatpush1.bf16.xpose.msra.mxu0 0
      %300 = vmatprep.subr.bf16.mxu0 0
      %301 = vmatpush1.bf16.xpose.msra.mxu0 0
      %302 = vmatprep.subr.bf16.mxu0 0
      %303 = vmatpush1.bf16.xpose.msra.mxu0 0
      %304 = vmatprep.subr.bf16.mxu0 0
      %305 = vmatpush1.bf16.xpose.msra.mxu0 0
      %306 = vmatprep.mubr.bf16.mxu0 0
      %307 = vmatmul.mubr.bf16.gmra.mrb[0].mxu0 %v271
      %v308 = vpop.f32.mrb[0].mxu0
      %v309 = vadd.f32 0.0, %v308
      %v310 = vpop.f32.mrb[0].mxu0
      %v311 = vpop.f32.mrb[0].mxu0
      %v312 = vpop.f32.mrb[0].mxu0
      %313 = vdwg.mxu0
      %s314 = smul.u32 %s21, 8
      %v315 = vlaneseq
      %v316 = vand.u32 %v315, 127
      %v317 = vstv %s314
      %v318 = vadd.s32 %v317, %v316
      %vm319 = vcmp.lt.s32.totalorder %v318, 5
      %v320 = vsel %vm319, %v309, -1e+30
      %v321 = vld [vmem:[#allocation2] sm:$0xff]
      %vm322 = vcmask 64512
      %v323 = vsel %vm322, %v320, -inf
      %324 = vmax.xlane.f32.xlu0 %v323
      %v325 = vpop.xlane.xlu0 %324
      %v326 = vmax.f32 %v321, %v325
      %v327 = vsub.f32 %v321, %v326
      %v328 = vmul.f32 %v327, 1.442695
      %v329 = vpow.pop %v328
      %331 = vset.pattern.permute.xlu0 0
      %332 = vperm.xlu0 %331, %v326
      %v333 = vpop.permute.xlu0 %332
      %v335 = vsub.f32 %v320, %v333
      %v336 = vmul.f32 %v335, 1.442695
      %v337 = vpow.pop %v336
      %v338 = vld [vmem:[#allocation3] sm:$0xff]
      %v339 = vmul.f32 %v329, %v338
      %v340 = vsel %vm322, %v337, 0.0
      %341 = vadd.xlane.f32.xlu0 %v340
      %v342 = vpop.xlane.xlu0 %341
      %v343 = vadd.f32 %v339, %v342
      %vm344 = vcmask 7168
      %345 = vst.msk [vmem:[#allocation3] sm:$0xff] %vm344, %v343
      %v346 = vld [vmem:[#allocation4] sm:$0xff]
      %348 = vset.pattern.permute.xlu0 0
      %349 = vperm.xlu0 %348, %v329
      %v350 = vpop.permute.xlu0 %349
      %v352 = vmul.f32 %v350, %v346
      %v353 = vpack.c.bf16 %v337, %v337
      %v354 = vld [vmem:[%s252] sm:$0xff]
      %v355 = vpack.c.bf16 %v354, %v354
      %v357 = vsel %vm322, %v353, 0
      %vm359 = vcmask 1043456
      %v361 = vsel %vm359, %v355, 0
      %363 = vmatprep.subr.bf16.mxu0 0
      %364 = vmatpush1.bf16.msra.mxu0 %v361
      %365 = vmatprep.subr.bf16.mxu0 0
      %366 = vmatpush1.bf16.msra.mxu0 0
      %367 = vmatprep.subr.bf16.mxu0 0
      %368 = vmatpush1.bf16.msra.mxu0 0
      %369 = vmatprep.subr.bf16.mxu0 0
      %370 = vmatpush1.bf16.msra.mxu0 0
      %371 = vmatprep.subr.bf16.mxu0 0
      %372 = vmatpush1.bf16.msra.mxu0 0
      %373 = vmatprep.subr.bf16.mxu0 0
      %374 = vmatpush1.bf16.msra.mxu0 0
      %375 = vmatprep.subr.bf16.mxu0 0
      %376 = vmatpush1.bf16.msra.mxu0 0
      %377 = vmatprep.subr.bf16.mxu0 0
      %378 = vmatpush1.bf16.msra.mxu0 0
      %379 = vmatprep.subr.bf16.mxu0 0
      %380 = vmatpush1.bf16.msra.mxu0 0
      %381 = vmatprep.subr.bf16.mxu0 0
      %382 = vmatpush1.bf16.msra.mxu0 0
      %383 = vmatprep.subr.bf16.mxu0 0
      %384 = vmatpush1.bf16.msra.mxu0 0
      %385 = vmatprep.subr.bf16.mxu0 0
      %386 = vmatpush1.bf16.msra.mxu0 0
      %387 = vmatprep.subr.bf16.mxu0 0
      %388 = vmatpush1.bf16.msra.mxu0 0
      %389 = vmatprep.subr.bf16.mxu0 0
      %390 = vmatpush1.bf16.msra.mxu0 0
      %391 = vmatprep.subr.bf16.mxu0 0
      %392 = vmatpush1.bf16.msra.mxu0 0
      %393 = vmatprep.subr.bf16.mxu0 0
      %394 = vmatpush1.bf16.msra.mxu0 0
      %395 = vmatprep.mubr.bf16.mxu0 0
      %396 = vmatmul.mubr.bf16.gmra.mrb[0].mxu0 %v357
      %v397 = vpop.f32.mrb[0].mxu0
      %v398 = vadd.f32 0.0, %v397
      %v399 = vpop.f32.mrb[0].mxu0
      %v400 = vpop.f32.mrb[0].mxu0
      %v401 = vpop.f32.mrb[0].mxu0
      %402 = vdwg.mxu0
      %v403 = vadd.f32 %v352, %v398
      %404 = vst [vmem:[#allocation4] sm:$0xff] %v403
      %405 = vst.msk [vmem:[#allocation2] sm:$0xff] %vm344, %v326
      // Predicated region
      $region37: #{closed_call.32} parent=31 // pred_check
        %p406 = pneg %p261
      $region38: #{closed_call.32} parent=31 // pred_check_branch
        %408 = sbr.rel (%p406) target = $region40
      $region39: #{closed_call.32} parent=31 // pred_region
        %v409 = vld [vmem:[#allocation3] sm:$0xff]
        %v410 = vrcp.pop %v409
        %v411 = vld [vmem:[#allocation4] sm:$0xff]
        %413 = vset.pattern.permute.xlu0 0
        %414 = vperm.xlu0 %413, %v410
        %v415 = vpop.permute.xlu0 %414
        %v417 = vmul.f32 %v411, %v415
        %418 = vst [vmem:[%s259] sm:$0xff] %v417
      $region40: #{closed_call.32} parent=31 // pred_fallthru
        _
      %p419 = scmp.lt.s32.totalorder %s19, 7
      %s420 = scalar_select %p419, %s19, 7
      %p421 = scmp.lt.s32.totalorder %s20, 0
      %s422 = scalar_select %p421, %s20, 0
      %s423 = sadd.s32 %s422, %s420
      %s424 = smul.addr %s423, 8
      %s425 = scalar_lea.vmem %s3, %s424
      // Predicated region
      $region41: #{closed_call.32} parent=31 // pred_check
        %p426 = pneg %p137
      $region42: #{closed_call.32} parent=31 // pred_check_branch
        %428 = sbr.rel (%p426) target = $region44
      $region43: #{closed_call.32} parent=31 // pred_region
        _
      $region44: #{closed_call.32} parent=31 // pred_fallthru
        _
    $region32: #{closed_call.32} parent=5 // pred_fallthru
      _
    %p429 = scmp.le.s32.totalorder 2, %s9
    // Predicated region
    $region45: #{closed_call.32} parent=5 // pred_check
      %p430 = pneg %p429
    $region46: #{closed_call.32} parent=5 // pred_check_branch
      %432 = sbr.rel (%p430) target = $region48
    $region47: #{closed_call.32} parent=5 // pred_region
      %s433 = ssub.s32 %s9, 2
      // Predicated region
      $region49: #{closed_call.32} parent=47 // pred_check
        %p434 = pneg %p143
      $region50: #{closed_call.32} parent=47 // pred_check_branch
        %436 = sbr.rel (%p434) target = $region52
      $region51: #{closed_call.32} parent=47 // pred_region
        %p437 = scmp.lt.s32.totalorder %s22, 7
        %s438 = scalar_select %p437, %s22, 7
        %p439 = scmp.lt.s32.totalorder %s23, 0
        %s440 = scalar_select %p439, %s23, 0
        %s441 = sadd.s32 %s440, %s438
        %s442 = smul.addr %s441, 8
        %s443 = scalar_lea.vmem %s3, %s442
      $region52: #{closed_call.32} parent=47 // pred_fallthru
        _
    $region48: #{closed_call.32} parent=5 // pred_fallthru
      _
  $region6: #{closed_call.32} parent=0 // loop_footer
    %s13 = sadd.s32 1, %s9
  $region7: #{closed_call.32} parent=0 // loop_footer_branch
    %8 = sbr.rel target = $region3
  $region8: #{closed_call.32} parent=0 // loop_exit
    _

// kernel: closed_call.33
$region0: #{closed_call.33}
  #allocation0 [shape = 'u32[]', space=smem, size = 0x4, offset = 0x4, fixed_abs, tag = 'smem constant byte address 0x4 - core index']
  #allocation1 [shape = 'u32[144,128]{1,0:T(1,128)}', space=vmem, size = 0x12000, scoped, tag = 'internal scratch']
  #allocation2 [shape = 'f32[16,128]{1,0:T(8,128)}', space=vmem, size = 0x2000, scoped, tag = 'scratch operand']
  %s0 = inlined_call_operand.vmem [shape: f32[16,128], index: 0, kind: input, shape index: {}]
  %s1 = inlined_call_operand.vmem [shape: bf16[128,128], index: 1, kind: input, shape index: {}]
  %s2 = inlined_call_operand.vmem [shape: f32[1,128], index: 2, kind: input, shape index: {}]
  %s3 = inlined_call_operand.vmem [shape: f32[16,128], index: 3, kind: input, shape index: {}]
  %s4 = inlined_call_operand.vmem [shape: f32[16,128], index: 4, kind: output, shape index: {}]
  %s5 = sld [smem:[#allocation0]]
  $region34: #{closed_call.33} parent=0
    _
  %s7 = ssub.s32 1, %s5
  %s8 = scalar_select 0, %s7, %s5
  // Predicated region
  $region2: #{closed_call.33} parent=0 // pred_check
    _
  $region3: #{closed_call.33} parent=0 // pred_check_branch
    %10 = sbr.rel (0) target = $region5
  $region4: #{closed_call.33} parent=0 // pred_region
    _
  $region5: #{closed_call.33} parent=0 // pred_fallthru
    _
  // Predicated region
  $region6: #{closed_call.33} parent=0 // pred_check
    _
  $region7: #{closed_call.33} parent=0 // pred_check_branch
    %12 = sbr.rel (0) target = $region9
  $region8: #{closed_call.33} parent=0 // pred_region
    _
  $region9: #{closed_call.33} parent=0 // pred_fallthru
    _
  // Predicated region
  $region10: #{closed_call.33} parent=0 // pred_check
    _
  $region11: #{closed_call.33} parent=0 // pred_check_branch
    %14 = sbr.rel (0) target = $region13
  $region12: #{closed_call.33} parent=0 // pred_region
    _
  $region13: #{closed_call.33} parent=0 // pred_fallthru
    _
  // Predicated region
  $region14: #{closed_call.33} parent=0 // pred_check
    _
  $region15: #{closed_call.33} parent=0 // pred_check_branch
    %16 = sbr.rel (0) target = $region17
  $region16: #{closed_call.33} parent=0 // pred_region
    _
  $region17: #{closed_call.33} parent=0 // pred_fallthru
    _
  %p18 = scmp.eq.s32.totalorder 0, 0
  // Predicated region
  $region18: #{closed_call.33} parent=0 // pred_check
    %p19 = pneg %p18
  $region19: #{closed_call.33} parent=0 // pred_check_branch
    %21 = sbr.rel (%p19) target = $region21
  $region20: #{closed_call.33} parent=0 // pred_region
    %22 = vst [vmem:[#allocation2] sm:$0xff] 0.0
    %23 = vst [vmem:[#allocation2 + $0x8] sm:$0xff] 0.0
  $region21: #{closed_call.33} parent=0 // pred_fallthru
    _
  %v24 = vld [vmem:[%s0] sm:$0xff]
  %v25 = vld [vmem:[%s0 + $0x8] sm:$0xff]
  %v26 = vpack.c.bf16 %v25, %v24
  %v27 = vld [vmem:[#allocation2] sm:$0xff]
  %v28 = vld [vmem:[#allocation2 + $0x8] sm:$0xff]
  %v29 = vld [vmem:[%s1] sm:$0xf]
  %v30 = vld [vmem:[%s1 + $0x4] sm:$0xf]
  %v31 = vld [vmem:[%s1 + $0x8] sm:$0xf]
  %v32 = vld [vmem:[%s1 + $0xc] sm:$0xf]
  %v33 = vld [vmem:[%s1 + $0x10] sm:$0xf]
  %v34 = vld [vmem:[%s1 + $0x14] sm:$0xf]
  %v35 = vld [vmem:[%s1 + $0x18] sm:$0xf]
  %v36 = vld [vmem:[%s1 + $0x1c] sm:$0xf]
  %v37 = vld [vmem:[%s1 + $0x20] sm:$0xf]
  %v38 = vld [vmem:[%s1 + $0x24] sm:$0xf]
  %v39 = vld [vmem:[%s1 + $0x28] sm:$0xf]
  %v40 = vld [vmem:[%s1 + $0x2c] sm:$0xf]
  %v41 = vld [vmem:[%s1 + $0x30] sm:$0xf]
  %v42 = vld [vmem:[%s1 + $0x34] sm:$0xf]
  %v43 = vld [vmem:[%s1 + $0x38] sm:$0xf]
  %v44 = vld [vmem:[%s1 + $0x3c] sm:$0xf]
  %v61 = vunpack.c.l.b16 %v29
  %v62 = vunpack.c.l.b16 %v30
  %v63 = vunpack.c.l.b16 %v31
  %v64 = vunpack.c.l.b16 %v32
  %v65 = vunpack.c.l.b16 %v33
  %v66 = vunpack.c.l.b16 %v34
  %v67 = vunpack.c.l.b16 %v35
  %v68 = vunpack.c.l.b16 %v36
  %v69 = vunpack.c.l.b16 %v37
  %v70 = vunpack.c.l.b16 %v38
  %v71 = vunpack.c.l.b16 %v39
  %v72 = vunpack.c.l.b16 %v40
  %v73 = vunpack.c.l.b16 %v41
  %v74 = vunpack.c.l.b16 %v42
  %v75 = vunpack.c.l.b16 %v43
  %v76 = vunpack.c.l.b16 %v44
  %v77 = vpack.c.b16 %v62, %v61
  %v78 = vpack.c.b16 %v64, %v63
  %v79 = vpack.c.b16 %v66, %v65
  %v80 = vpack.c.b16 %v68, %v67
  %v81 = vpack.c.b16 %v70, %v69
  %v82 = vpack.c.b16 %v72, %v71
  %v83 = vpack.c.b16 %v74, %v73
  %v84 = vpack.c.b16 %v76, %v75
  %93 = vmatprep.subr.bf16.mxu0 0
  %94 = vmatpush1.bf16.msra.mxu0 %v77
  %95 = vmatprep.subr.bf16.mxu0 0
  %96 = vmatpush1.bf16.msra.mxu0 %v78
  %97 = vmatprep.subr.bf16.mxu0 0
  %98 = vmatpush1.bf16.msra.mxu0 %v79
  %99 = vmatprep.subr.bf16.mxu0 0
  %100 = vmatpush1.bf16.msra.mxu0 %v80
  %101 = vmatprep.subr.bf16.mxu0 0
  %102 = vmatpush1.bf16.msra.mxu0 %v81
  %103 = vmatprep.subr.bf16.mxu0 0
  %104 = vmatpush1.bf16.msra.mxu0 %v82
  %105 = vmatprep.subr.bf16.mxu0 0
  %106 = vmatpush1.bf16.msra.mxu0 %v83
  %107 = vmatprep.subr.bf16.mxu0 0
  %108 = vmatpush1.bf16.msra.mxu0 %v84
  %109 = vmatprep.subr.bf16.mxu0 0
  %110 = vmatpush1.bf16.msra.mxu0 0
  %111 = vmatprep.subr.bf16.mxu0 0
  %112 = vmatpush1.bf16.msra.mxu0 0
  %113 = vmatprep.subr.bf16.mxu0 0
  %114 = vmatpush1.bf16.msra.mxu0 0
  %115 = vmatprep.subr.bf16.mxu0 0
  %116 = vmatpush1.bf16.msra.mxu0 0
  %117 = vmatprep.subr.bf16.mxu0 0
  %118 = vmatpush1.bf16.msra.mxu0 0
  %119 = vmatprep.subr.bf16.mxu0 0
  %120 = vmatpush1.bf16.msra.mxu0 0
  %121 = vmatprep.subr.bf16.mxu0 0
  %122 = vmatpush1.bf16.msra.mxu0 0
  %123 = vmatprep.subr.bf16.mxu0 0
  %124 = vmatpush1.bf16.msra.mxu0 0
  %125 = vmatprep.mubr.bf16.mxu0 0
  %126 = vmatmul.mubr.bf16.gmra.mrb[0].mxu0 %v26
  %v127 = vpop.f32.mrb[0].mxu0
  %v128 = vadd.f32 0.0, %v127
  %v129 = vpop.f32.mrb[0].mxu0
  %v130 = vpop.f32.mrb[0].mxu0
  %v131 = vadd.f32 0.0, %v130
  %v132 = vpop.f32.mrb[0].mxu0
  %133 = vdwg.mxu0
  %v134 = vadd.f32 %v27, %v128
  %v135 = vadd.f32 %v28, %v131
  %136 = vst [vmem:[#allocation2] sm:$0xff] %v134
  %137 = vst [vmem:[#allocation2 + $0x8] sm:$0xff] %v135
  // Predicated region
  $region22: #{closed_call.33} parent=0 // pred_check
    %p138 = pneg %p18
  $region23: #{closed_call.33} parent=0 // pred_check_branch
    %140 = sbr.rel (%p138) target = $region25
  $region24: #{closed_call.33} parent=0 // pred_region
    %v141 = vld [vmem:[#allocation2] sm:$0xff]
    %v142 = vld [vmem:[#allocation2 + $0x8] sm:$0xff]
    %v143 = vld [vmem:[%s2] sm:$0x1]
    %v145 = vlaneseq
    %v146 = vshrl.u32 %v145, 7
    %v147 = vsub.s32 0, %v146
    %v148 = vrot.slane %v143, %v147
    %v150 = vadd.f32 %v141, %v148
    %v151 = vadd.f32 %v142, %v148
    %v152 = vld [vmem:[%s3] sm:$0xff]
    %v153 = vld [vmem:[%s3 + $0x8] sm:$0xff]
    %v154 = vadd.f32 %v150, %v152
    %v155 = vadd.f32 %v151, %v153
    %156 = vst [vmem:[%s4] sm:$0xff] %v154
    %157 = vst [vmem:[%s4 + $0x8] sm:$0xff] %v155
  $region25: #{closed_call.33} parent=0 // pred_fallthru
    _
  // Predicated region
  $region26: #{closed_call.33} parent=0 // pred_check
    _
  $region27: #{closed_call.33} parent=0 // pred_check_branch
    %159 = sbr.rel (0) target = $region29
  $region28: #{closed_call.33} parent=0 // pred_region
    _
  $region29: #{closed_call.33} parent=0 // pred_fallthru
    _
  // Predicated region
  $region30: #{closed_call.33} parent=0 // pred_check
    _
  $region31: #{closed_call.33} parent=0 // pred_check_branch
    %161 = sbr.rel (0) target = $region33
  $region32: #{closed_call.33} parent=0 // pred_region
    _
  $region33: #{closed_call.33} parent=0 // pred_fallthru
    _

// kernel: closed_call.34
$region0: #{closed_call.34}
  #allocation0 [shape = 'u32[]', space=smem, size = 0x4, offset = 0x4, fixed_abs, tag = 'smem constant byte address 0x4 - core index']
  #allocation1 [shape = 'u32[144,128]{1,0:T(1,128)}', space=vmem, size = 0x12000, scoped, tag = 'internal scratch']
  #allocation2 [shape = 'f32[16,128]{1,0:T(8,128)}', space=vmem, size = 0x2000, scoped, tag = 'scratch operand']
  %s0 = inlined_call_operand.vmem [shape: f32[16,32], index: 0, kind: input, shape index: {}]
  %s1 = inlined_call_operand.vmem [shape: bf16[32,128], index: 1, kind: input, shape index: {}]
  %s2 = inlined_call_operand.vmem [shape: f32[1,128], index: 2, kind: input, shape index: {}]
  %s3 = inlined_call_operand.vmem [shape: f32[1,32], index: 3, kind: input, shape index: {}]
  %s4 = inlined_call_operand.vmem [shape: f32[1,32], index: 4, kind: input, shape index: {}]
  %s5 = inlined_call_operand.vmem [shape: f32[16,128], index: 5, kind: output, shape index: {}]
  %s6 = sld [smem:[#allocation0]]
  $region38: #{closed_call.34} parent=0
    _
  %s8 = ssub.s32 1, %s6
  %s9 = scalar_select 0, %s8, %s6
  // Predicated region
  $region2: #{closed_call.34} parent=0 // pred_check
    _
  $region3: #{closed_call.34} parent=0 // pred_check_branch
    %11 = sbr.rel (0) target = $region5
  $region4: #{closed_call.34} parent=0 // pred_region
    _
  $region5: #{closed_call.34} parent=0 // pred_fallthru
    _
  // Predicated region
  $region6: #{closed_call.34} parent=0 // pred_check
    _
  $region7: #{closed_call.34} parent=0 // pred_check_branch
    %13 = sbr.rel (0) target = $region9
  $region8: #{closed_call.34} parent=0 // pred_region
    _
  $region9: #{closed_call.34} parent=0 // pred_fallthru
    _
  // Predicated region
  $region10: #{closed_call.34} parent=0 // pred_check
    _
  $region11: #{closed_call.34} parent=0 // pred_check_branch
    %15 = sbr.rel (0) target = $region13
  $region12: #{closed_call.34} parent=0 // pred_region
    _
  $region13: #{closed_call.34} parent=0 // pred_fallthru
    _
  // Predicated region
  $region14: #{closed_call.34} parent=0 // pred_check
    _
  $region15: #{closed_call.34} parent=0 // pred_check_branch
    %17 = sbr.rel (0) target = $region17
  $region16: #{closed_call.34} parent=0 // pred_region
    _
  $region17: #{closed_call.34} parent=0 // pred_fallthru
    _
  // Predicated region
  $region18: #{closed_call.34} parent=0 // pred_check
    _
  $region19: #{closed_call.34} parent=0 // pred_check_branch
    %19 = sbr.rel (0) target = $region21
  $region20: #{closed_call.34} parent=0 // pred_region
    _
  $region21: #{closed_call.34} parent=0 // pred_fallthru
    _
  %p21 = scmp.eq.s32.totalorder 0, 0
  // Predicated region
  $region22: #{closed_call.34} parent=0 // pred_check
    %p22 = pneg %p21
  $region23: #{closed_call.34} parent=0 // pred_check_branch
    %24 = sbr.rel (%p22) target = $region25
  $region24: #{closed_call.34} parent=0 // pred_region
    %25 = vst [vmem:[#allocation2] sm:$0xff] 0.0
    %26 = vst [vmem:[#allocation2 + $0x8] sm:$0xff] 0.0
  $region25: #{closed_call.34} parent=0 // pred_fallthru
    _
  %v27 = vld [vmem:[%s0] sm:$0xff]
  %v28 = vld [vmem:[%s0 + $0x8] sm:$0xff]
  %vm29 = vcmask 261120
  %v30 = vsel %vm29, %v27, 0.0
  %31 = vadd.xlane.f32.xlu0 %v30
  %v32 = vpop.xlane.xlu0 %31
  %v33 = vsel %vm29, %v28, 0.0
  %34 = vadd.xlane.f32.xlu0 %v33
  %v35 = vpop.xlane.xlu0 %34
  %v36 = vrcp.pop 32.0
  %v37 = vmul.f32 %v32, %v36
  %v38 = vmul.f32 %v35, %v36
  %v39 = vsub.f32 %v27, %v37
  %v40 = vsub.f32 %v28, %v38
  %v41 = vmul.f32 %v39, %v39
  %v42 = vmul.f32 %v40, %v40
  %v43 = vsel %vm29, %v41, 0.0
  %44 = vadd.xlane.f32.xlu0 %v43
  %v45 = vpop.xlane.xlu0 %44
  %v46 = vsel %vm29, %v42, 0.0
  %47 = vadd.xlane.f32.xlu0 %v46
  %v48 = vpop.xlane.xlu0 %47
  %v49 = vmul.f32 %v45, %v36
  %v50 = vmul.f32 %v48, %v36
  %v51 = vadd.f32 %v49, 1e-05
  %v52 = vadd.f32 %v50, 1e-05
  %v53 = vrsqrt.pop %v51
  %v54 = vrsqrt.pop %v52
  %v55 = vmul.f32 %v39, %v53
  %v56 = vmul.f32 %v40, %v54
  %v57 = vld [vmem:[%s3] sm:$0x1]
  %v59 = vlaneseq
  %v60 = vshrl.u32 %v59, 7
  %v61 = vsub.s32 0, %v60
  %v62 = vrot.slane %v57, %v61
  %v64 = vmul.f32 %v55, %v62
  %v65 = vmul.f32 %v56, %v62
  %v66 = vld [vmem:[%s4] sm:$0x1]
  %v68 = vlaneseq
  %v69 = vshrl.u32 %v68, 7
  %v70 = vsub.s32 0, %v69
  %v71 = vrot.slane %v66, %v70
  %v73 = vadd.f32 %v64, %v71
  %v74 = vadd.f32 %v65, %v71
  %v75 = vpack.c.bf16 %v74, %v73
  %v76 = vld [vmem:[#allocation2] sm:$0xff]
  %v77 = vld [vmem:[#allocation2 + $0x8] sm:$0xff]
  %v78 = vld [vmem:[%s1] sm:$0xf]
  %v79 = vld [vmem:[%s1 + $0x4] sm:$0xf]
  %v80 = vld [vmem:[%s1 + $0x8] sm:$0xf]
  %v81 = vld [vmem:[%s1 + $0xc] sm:$0xf]
  %v86 = vunpack.c.l.b16 %v78
  %v87 = vunpack.c.l.b16 %v79
  %v88 = vunpack.c.l.b16 %v80
  %v89 = vunpack.c.l.b16 %v81
  %v90 = vpack.c.b16 %v87, %v86
  %v91 = vpack.c.b16 %v89, %v88
  %v95 = vsel %vm29, %v75, 0
  %97 = vmatprep.subr.bf16.mxu0 0
  %98 = vmatpush1.bf16.msra.mxu0 %v90
  %99 = vmatprep.subr.bf16.mxu0 0
  %100 = vmatpush1.bf16.msra.mxu0 %v91
  %101 = vmatprep.subr.bf16.mxu0 0
  %102 = vmatpush1.bf16.msra.mxu0 0
  %103 = vmatprep.subr.bf16.mxu0 0
  %104 = vmatpush1.bf16.msra.mxu0 0
  %105 = vmatprep.subr.bf16.mxu0 0
  %106 = vmatpush1.bf16.msra.mxu0 0
  %107 = vmatprep.subr.bf16.mxu0 0
  %108 = vmatpush1.bf16.msra.mxu0 0
  %109 = vmatprep.subr.bf16.mxu0 0
  %110 = vmatpush1.bf16.msra.mxu0 0
  %111 = vmatprep.subr.bf16.mxu0 0
  %112 = vmatpush1.bf16.msra.mxu0 0
  %113 = vmatprep.subr.bf16.mxu0 0
  %114 = vmatpush1.bf16.msra.mxu0 0
  %115 = vmatprep.subr.bf16.mxu0 0
  %116 = vmatpush1.bf16.msra.mxu0 0
  %117 = vmatprep.subr.bf16.mxu0 0
  %118 = vmatpush1.bf16.msra.mxu0 0
  %119 = vmatprep.subr.bf16.mxu0 0
  %120 = vmatpush1.bf16.msra.mxu0 0
  %121 = vmatprep.subr.bf16.mxu0 0
  %122 = vmatpush1.bf16.msra.mxu0 0
  %123 = vmatprep.subr.bf16.mxu0 0
  %124 = vmatpush1.bf16.msra.mxu0 0
  %125 = vmatprep.subr.bf16.mxu0 0
  %126 = vmatpush1.bf16.msra.mxu0 0
  %127 = vmatprep.subr.bf16.mxu0 0
  %128 = vmatpush1.bf16.msra.mxu0 0
  %129 = vmatprep.mubr.bf16.mxu0 0
  %130 = vmatmul.mubr.bf16.gmra.mrb[0].mxu0 %v95
  %v131 = vpop.f32.mrb[0].mxu0
  %v132 = vadd.f32 0.0, %v131
  %v133 = vpop.f32.mrb[0].mxu0
  %v134 = vpop.f32.mrb[0].mxu0
  %v135 = vadd.f32 0.0, %v134
  %v136 = vpop.f32.mrb[0].mxu0
  %137 = vdwg.mxu0
  %v138 = vadd.f32 %v76, %v132
  %v139 = vadd.f32 %v77, %v135
  %140 = vst [vmem:[#allocation2] sm:$0xff] %v138
  %141 = vst [vmem:[#allocation2 + $0x8] sm:$0xff] %v139
  // Predicated region
  $region26: #{closed_call.34} parent=0 // pred_check
    %p142 = pneg %p21
  $region27: #{closed_call.34} parent=0 // pred_check_branch
    %144 = sbr.rel (%p142) target = $region29
  $region28: #{closed_call.34} parent=0 // pred_region
    %v145 = vld [vmem:[#allocation2] sm:$0xff]
    %v146 = vld [vmem:[#allocation2 + $0x8] sm:$0xff]
    %v147 = vld [vmem:[%s2] sm:$0x1]
    %v149 = vlaneseq
    %v150 = vshrl.u32 %v149, 7
    %v151 = vsub.s32 0, %v150
    %v152 = vrot.slane %v147, %v151
    %v154 = vadd.f32 %v145, %v152
    %v155 = vadd.f32 %v146, %v152
    %v156 = vmul.f32 %v154, 1.702
    %v157 = vmul.f32 %v155, 1.702
    %v158 = vxor.u32 %v156, 2147483648
    %v159 = vxor.u32 %v157, 2147483648
    %v160 = vmul.f32 %v158, 1.442695
    %v161 = vpow.pop %v160
    %v162 = vmul.f32 %v159, 1.442695
    %v163 = vpow.pop %v162
    %v164 = vadd.f32 %v161, 1.0
    %v165 = vadd.f32 %v163, 1.0
    %v166 = vrcp.pop %v164
    %v167 = vmul.f32 1.0, %v166
    %v168 = vrcp.pop %v165
    %v169 = vmul.f32 1.0, %v168
    %v170 = vmul.f32 %v154, %v167
    %v171 = vmul.f32 %v155, %v169
    %172 = vst [vmem:[%s5] sm:$0xff] %v170
    %173 = vst [vmem:[%s5 + $0x8] sm:$0xff] %v171
  $region29: #{closed_call.34} parent=0 // pred_fallthru
    _
  // Predicated region
  $region30: #{closed_call.34} parent=0 // pred_check
    _
  $region31: #{closed_call.34} parent=0 // pred_check_branch
    %175 = sbr.rel (0) target = $region33
  $region32: #{closed_call.34} parent=0 // pred_region
    _
  $region33: #{closed_call.34} parent=0 // pred_fallthru
    _
  // Predicated region
  $region34: #{closed_call.34} parent=0 // pred_check
    _
  $region35: #{closed_call.34} parent=0 // pred_check_branch
    %177 = sbr.rel (0) target = $region37
  $region36: #{closed_call.34} parent=0 // pred_region
    _
  $region37: #{closed_call.34} parent=0 // pred_fallthru
    _

</llo_original>
